<compile_context>
chip_gen: v5e
topology: v5e:2x2
jax: 0.10.0
libtpu: 0.0.40
codegen_flags: <defaults>
</compile_context>

<pallas_src>
import functools

import jax
import jax.numpy as jnp
from jax.experimental import pallas as pl
from jax.experimental.pallas import tpu as pltpu

IN_DIM = 784      # 28*28 input features
HIDDEN = 200      # nn.Linear(784, 200) / nn.Linear(200, 200)
N_CLASSES = 10
H_PAD = 256       # hidden padded to a clean lane multiple
OUT_PAD = 128     # logits padded so the output block is lane-dense


def mlp_kernel(x_ref, w1_ref, b1_ref, w2_ref, b2_ref, w3_ref, b3_ref, o_ref):
    # fc1 + ReLU : bf16 x bf16 -> f32 accumulate on the MXU, epilogue in f32 on the VPU.
    h1 = jnp.dot(x_ref[...], w1_ref[...], preferred_element_type=jnp.float32)
    h1 = jnp.maximum(h1 + b1_ref[...], 0.0).astype(jnp.bfloat16)
    # fc2 + ReLU
    h2 = jnp.dot(h1, w2_ref[...], preferred_element_type=jnp.float32)
    h2 = jnp.maximum(h2 + b2_ref[...], 0.0).astype(jnp.bfloat16)
    # fc3 (no activation); lane-dense (TB, 128) store, real logits live in lanes 0..9.
    out = jnp.dot(h2, w3_ref[...], preferred_element_type=jnp.float32) + b3_ref[...]
    o_ref[...] = out.astype(o_ref.dtype)


def prepare_params(w1, b1, w2, b2, w3, b3):
    """One-time: zero-pad to lane-aligned shapes, cast matmul weights to bf16, biases f32."""
    def pad2(w, rows, cols):
        return jnp.pad(w, ((0, rows - w.shape[0]), (0, cols - w.shape[1])))

    def pad_bias(b, cols):
        b = b.reshape(1, -1)
        return jnp.pad(b, ((0, 0), (0, cols - b.shape[1]))).astype(jnp.float32)

    w1p = pad2(w1, IN_DIM, H_PAD).astype(jnp.bfloat16)
    w2p = pad2(w2, H_PAD, H_PAD).astype(jnp.bfloat16)
    w3p = pad2(w3, H_PAD, OUT_PAD).astype(jnp.bfloat16)
    return w1p, pad_bias(b1, H_PAD), w2p, pad_bias(b2, H_PAD), w3p, pad_bias(b3, OUT_PAD)


@functools.partial(jax.jit, static_argnames=("tb",))
def mnist_2nn_forward(x, w1p, b1p, w2p, b2p, w3p, b3p, *, tb=128):
    B = x.shape[0]
    n_tiles = pl.cdiv(B, tb)
    b_pad = n_tiles * tb

    xb = x.astype(jnp.bfloat16)
    if b_pad != B:
        xb = jnp.pad(xb, ((0, b_pad - B), (0, 0)))

    const = lambda shape: pl.BlockSpec(shape, lambda i: (0, 0))

    out_padded = pl.pallas_call(
        mlp_kernel,
        out_shape=jax.ShapeDtypeStruct((b_pad, OUT_PAD), jnp.float32),
        grid=(n_tiles,),
        in_specs=[
            pl.BlockSpec((tb, IN_DIM), lambda i: (i, 0)),   # activations: batch-tiled
            const(w1p.shape), const(b1p.shape),              # weights/biases: VMEM-resident
            const(w2p.shape), const(b2p.shape),
            const(w3p.shape), const(b3p.shape),
        ],
        out_specs=pl.BlockSpec((tb, OUT_PAD), lambda i: (i, 0)),
        compiler_params=pltpu.CompilerParams(
            dimension_semantics=("parallel",),
        ),
    )(xb, w1p, b1p, w2p, b2p, w3p, b3p)

    return out_padded[:B, :N_CLASSES]


def init_params(key):
    # PyTorch-like uniform(-1/sqrt(fan_in), 1/sqrt(fan_in)) init, f32, original shapes.
    ks = jax.random.split(key, 6)

    def lin(kw, kb, fan_in, fan_out):
        bound = 1.0 / jnp.sqrt(fan_in)
        w = jax.random.uniform(kw, (fan_in, fan_out), jnp.float32, -bound, bound)
        b = jax.random.uniform(kb, (fan_out,), jnp.float32, -bound, bound)
        return w, b

    w1, b1 = lin(ks[0], ks[1], IN_DIM, HIDDEN)
    w2, b2 = lin(ks[2], ks[3], HIDDEN, HIDDEN)
    w3, b3 = lin(ks[4], ks[5], HIDDEN, N_CLASSES)
    return w1, b1, w2, b2, w3, b3


if __name__ == "__main__":
    key = jax.random.PRNGKey(0)
    k_x, k_p = jax.random.split(key)

    B = 256  # two batch tiles of TB=128 -> exercises the pipelined grid
    x = jax.random.normal(k_x, (B, IN_DIM), jnp.float32)
    w1, b1, w2, b2, w3, b3 = init_params(k_p)
    params = prepare_params(w1, b1, w2, b2, w3, b3)

    out = mnist_2nn_forward(x, *params, tb=128)
    out = jax.block_until_ready(out)
    assert out.shape == (B, N_CLASSES)

    # Reference 1: mimic the kernel's bf16/f32 mixed precision in plain JAX.
    w1p, b1p, w2p, b2p, w3p, b3p = params
    xb = x.astype(jnp.bfloat16)
    h1 = jnp.maximum(jnp.dot(xb, w1p, preferred_element_type=jnp.float32) + b1p, 0.0)
    h1 = h1.astype(jnp.bfloat16)
    h2 = jnp.maximum(jnp.dot(h1, w2p, preferred_element_type=jnp.float32) + b2p, 0.0)
    h2 = h2.astype(jnp.bfloat16)
    ref_bf16 = (jnp.dot(h2, w3p, preferred_element_type=jnp.float32) + b3p)[:, :N_CLASSES]
    assert jnp.allclose(out, ref_bf16, atol=2e-2, rtol=2e-2)

    # Reference 2: full f32 PyTorch-semantics forward (loose tolerance due to bf16 weights).
    hf = jnp.maximum(x @ w1 + b1, 0.0)
    hf = jnp.maximum(hf @ w2 + b2, 0.0)
    ref_f32 = hf @ w3 + b3
    assert jnp.allclose(out, ref_f32, atol=5e-2, rtol=5e-2)

    print("KERNEL_OK")
</pallas_src>

<mosaic_0001>
module attributes {stable_mosaic.version = 11 : i64} {
  func.func @mlp_kernel(%arg0: i32, %arg1: memref<128x784xbf16, #tpu.memory_space<vmem>>, %arg2: memref<784x256xbf16, #tpu.memory_space<vmem>>, %arg3: memref<1x256xf32, #tpu.memory_space<vmem>>, %arg4: memref<256x256xbf16, #tpu.memory_space<vmem>>, %arg5: memref<1x256xf32, #tpu.memory_space<vmem>>, %arg6: memref<256x128xbf16, #tpu.memory_space<vmem>>, %arg7: memref<1x128xf32, #tpu.memory_space<vmem>>, %arg8: memref<128x128xf32, #tpu.memory_space<vmem>>) attributes {dimension_semantics = [#tpu.dimension_semantics<parallel>], iteration_bounds = array<i64: 2>, scalar_prefetch = 0 : i64, scratch_operands = 0 : i64, tpu.core_type = #tpu.core_type<tc>, window_params = [{transform_indices = @transform_0, window_bounds = array<i64: 128, 784>}, {pipeline_mode = #tpu.pipeline_mode<synchronous>, transform_indices = @transform_1, window_bounds = array<i64: 784, 256>}, {pipeline_mode = #tpu.pipeline_mode<synchronous>, transform_indices = @transform_2, window_bounds = array<i64: 1, 256>}, {pipeline_mode = #tpu.pipeline_mode<synchronous>, transform_indices = @transform_3, window_bounds = array<i64: 256, 256>}, {pipeline_mode = #tpu.pipeline_mode<synchronous>, transform_indices = @transform_4, window_bounds = array<i64: 1, 256>}, {pipeline_mode = #tpu.pipeline_mode<synchronous>, transform_indices = @transform_5, window_bounds = array<i64: 256, 128>}, {pipeline_mode = #tpu.pipeline_mode<synchronous>, transform_indices = @transform_6, window_bounds = array<i64: 1, 128>}, {transform_indices = @transform_7, window_bounds = array<i64: 128, 128>}]} {
    %c0 = arith.constant 0 : index
    %c0_0 = arith.constant 0 : index
    %0 = vector.load %arg1[%c0, %c0_0] : memref<128x784xbf16, #tpu.memory_space<vmem>>, vector<128x784xbf16>
    %c0_1 = arith.constant 0 : index
    %c0_2 = arith.constant 0 : index
    %1 = vector.load %arg2[%c0_1, %c0_2] : memref<784x256xbf16, #tpu.memory_space<vmem>>, vector<784x256xbf16>
    %cst = arith.constant dense<0.000000e+00> : vector<128x256xf32>
    %2 = tpu.matmul %0, %1, %cst {dimension_numbers = #tpu.dot_dimension_numbers<[1], [0], [0], [1], [0, 0, 1, 1], [], []>} : vector<128x784xbf16>, vector<784x256xbf16>, vector<128x256xf32> -> vector<128x256xf32>
    %c0_3 = arith.constant 0 : index
    %c0_4 = arith.constant 0 : index
    %3 = vector.load %arg3[%c0_3, %c0_4] : memref<1x256xf32, #tpu.memory_space<vmem>>, vector<1x256xf32>
    %4 = vector.broadcast %3 : vector<1x256xf32> to vector<128x256xf32>
    %5 = arith.addf %2, %4 : vector<128x256xf32>
    %cst_5 = arith.constant 0.000000e+00 : f32
    %6 = vector.broadcast %cst_5 : f32 to vector<128x256xf32>
    %7 = arith.maximumf %5, %6 : vector<128x256xf32>
    %8 = arith.truncf %7 : vector<128x256xf32> to vector<128x256xbf16>
    %c0_6 = arith.constant 0 : index
    %c0_7 = arith.constant 0 : index
    %9 = vector.load %arg4[%c0_6, %c0_7] : memref<256x256xbf16, #tpu.memory_space<vmem>>, vector<256x256xbf16>
    %cst_8 = arith.constant dense<0.000000e+00> : vector<128x256xf32>
    %10 = tpu.matmul %8, %9, %cst_8 {dimension_numbers = #tpu.dot_dimension_numbers<[1], [0], [0], [1], [0, 0, 1, 1], [], []>} : vector<128x256xbf16>, vector<256x256xbf16>, vector<128x256xf32> -> vector<128x256xf32>
    %c0_9 = arith.constant 0 : index
    %c0_10 = arith.constant 0 : index
    %11 = vector.load %arg5[%c0_9, %c0_10] : memref<1x256xf32, #tpu.memory_space<vmem>>, vector<1x256xf32>
    %12 = vector.broadcast %11 : vector<1x256xf32> to vector<128x256xf32>
    %13 = arith.addf %10, %12 : vector<128x256xf32>
    %cst_11 = arith.constant 0.000000e+00 : f32
    %14 = vector.broadcast %cst_11 : f32 to vector<128x256xf32>
    %15 = arith.maximumf %13, %14 : vector<128x256xf32>
    %16 = arith.truncf %15 : vector<128x256xf32> to vector<128x256xbf16>
    %c0_12 = arith.constant 0 : index
    %c0_13 = arith.constant 0 : index
    %17 = vector.load %arg6[%c0_12, %c0_13] : memref<256x128xbf16, #tpu.memory_space<vmem>>, vector<256x128xbf16>
    %cst_14 = arith.constant dense<0.000000e+00> : vector<128x128xf32>
    %18 = tpu.matmul %16, %17, %cst_14 {dimension_numbers = #tpu.dot_dimension_numbers<[1], [0], [0], [1], [0, 0, 1, 1], [], []>} : vector<128x256xbf16>, vector<256x128xbf16>, vector<128x128xf32> -> vector<128x128xf32>
    %c0_15 = arith.constant 0 : index
    %c0_16 = arith.constant 0 : index
    %19 = vector.load %arg7[%c0_15, %c0_16] : memref<1x128xf32, #tpu.memory_space<vmem>>, vector<1x128xf32>
    %20 = vector.broadcast %19 : vector<1x128xf32> to vector<128x128xf32>
    %21 = arith.addf %18, %20 : vector<128x128xf32>
    %c0_17 = arith.constant 0 : index
    %c0_18 = arith.constant 0 : index
    %22 = vector.load %arg8[%c0_17, %c0_18] : memref<128x128xf32, #tpu.memory_space<vmem>>, vector<128x128xf32>
    tpu.vector_store %arg8[%c0_17, %c0_18], %21 {strides = array<i32>} : memref<128x128xf32, #tpu.memory_space<vmem>>, vector<128x128xf32>,
    return
  }
  func.func @transform_0(%arg0: i32) -> (i32, i32) {
    %c0_i32 = arith.constant 0 : i32
    %c0_i32_0 = arith.constant 0 : i32
    return %arg0, %c0_i32 : i32, i32
  }
  func.func @transform_1(%arg0: i32) -> (i32, i32) {
    %c0_i32 = arith.constant 0 : i32
    %c0_i32_0 = arith.constant 0 : i32
    %c0_i32_1 = arith.constant 0 : i32
    return %c0_i32, %c0_i32_0 : i32, i32
  }
  func.func @transform_2(%arg0: i32) -> (i32, i32) {
    %c0_i32 = arith.constant 0 : i32
    %c0_i32_0 = arith.constant 0 : i32
    %c0_i32_1 = arith.constant 0 : i32
    return %c0_i32, %c0_i32_0 : i32, i32
  }
  func.func @transform_3(%arg0: i32) -> (i32, i32) {
    %c0_i32 = arith.constant 0 : i32
    %c0_i32_0 = arith.constant 0 : i32
    %c0_i32_1 = arith.constant 0 : i32
    return %c0_i32, %c0_i32_0 : i32, i32
  }
  func.func @transform_4(%arg0: i32) -> (i32, i32) {
    %c0_i32 = arith.constant 0 : i32
    %c0_i32_0 = arith.constant 0 : i32
    %c0_i32_1 = arith.constant 0 : i32
    return %c0_i32, %c0_i32_0 : i32, i32
  }
  func.func @transform_5(%arg0: i32) -> (i32, i32) {
    %c0_i32 = arith.constant 0 : i32
    %c0_i32_0 = arith.constant 0 : i32
    %c0_i32_1 = arith.constant 0 : i32
    return %c0_i32, %c0_i32_0 : i32, i32
  }
  func.func @transform_6(%arg0: i32) -> (i32, i32) {
    %c0_i32 = arith.constant 0 : i32
    %c0_i32_0 = arith.constant 0 : i32
    %c0_i32_1 = arith.constant 0 : i32
    return %c0_i32, %c0_i32_0 : i32, i32
  }
  func.func @transform_7(%arg0: i32) -> (i32, i32) {
    %c0_i32 = arith.constant 0 : i32
    %c0_i32_0 = arith.constant 0 : i32
    return %arg0, %c0_i32 : i32, i32
  }
}

</mosaic_0001>

<llo_original>
// kernel: mnist_2nn_forward.1
$region0: #{mnist_2nn_forward.1}
  #allocation0 [shape = 'u32[]', space=smem, size = 0x4, offset = 0x4, fixed_abs, tag = 'smem constant byte address 0x4 - core index']
  #allocation1 [shape = 'u32[72,128]{1,0:T(1,128)}', space=vmem, size = 0x9000, scoped, tag = 'internal scratch']
  %s0 = inlined_call_operand.vmem [shape: bf16[256,784], index: 0, kind: input, shape index: {}]
  %s1 = inlined_call_operand.vmem [shape: bf16[784,256], index: 1, kind: input, shape index: {}]
  %s2 = inlined_call_operand.vmem [shape: f32[1,256], index: 2, kind: input, shape index: {}]
  %s3 = inlined_call_operand.vmem [shape: bf16[256,256], index: 3, kind: input, shape index: {}]
  %s4 = inlined_call_operand.vmem [shape: f32[1,256], index: 4, kind: input, shape index: {}]
  %s5 = inlined_call_operand.vmem [shape: bf16[256,128], index: 5, kind: input, shape index: {}]
  %s6 = inlined_call_operand.vmem [shape: f32[1,128], index: 6, kind: input, shape index: {}]
  %s7 = inlined_call_operand.vmem [shape: f32[256,128], index: 7, kind: output, shape index: {}]
  %s8 = sld [smem:[#allocation0]]
  $region61: #{mnist_2nn_forward.1} parent=0
    _
  %s10 = ssub.s32 1, %s8
  %s11 = scalar_select 0, %s10, %s8
  loop: start=0, step=1, limit=4
  $region2: #{mnist_2nn_forward.1} parent=0 // loop_pre_header
    _
  $region3: #{mnist_2nn_forward.1} parent=0 // loop_header
    %s13 = sphi 0, %s17
    %p14 = scmp.ge.s32.totalorder %s13, 4
    %s23 = sphi 0, %s25
    %s26 = sphi 0, %s23
    %s27 = sphi 0, %s26
    %s43 = sphi 0, %s27
    %s47 = sphi 0, %s47
    %s49 = sphi 0, %s47
    %s50 = sphi 0, %s49
    %s64 = sphi 0, %s50
    %s68 = sphi 0, %s68
    %s70 = sphi 0, %s68
    %s71 = sphi 0, %s70
    %s85 = sphi 0, %s71
    %s89 = sphi 0, %s89
    %s91 = sphi 0, %s89
    %s92 = sphi 0, %s91
    %s106 = sphi 0, %s92
    %s110 = sphi 0, %s110
    %s112 = sphi 0, %s110
    %s113 = sphi 0, %s112
    %s127 = sphi 0, %s113
    %s131 = sphi 0, %s131
    %s133 = sphi 0, %s131
    %s134 = sphi 0, %s133
    %s148 = sphi 0, %s134
    %s152 = sphi 0, %s152
    %s154 = sphi 0, %s152
    %s155 = sphi 0, %s154
    %s169 = sphi 0, %s155
    %s175 = sphi 0, %s177
    %s178 = sphi 0, %s175
    %s179 = sphi 0, %s178
    %s195 = sphi 0, %s179
  $region4: #{mnist_2nn_forward.1} parent=0 // loop_header_branch
    %16 = sbr.rel (%p14) target = $region8
  $region5: #{mnist_2nn_forward.1} parent=0 // loop_body
    %s18 = ssub.s32 %s13, 1
    %s19 = ssub.s32 %s13, 2
    %s20 = sadd.s32 %s13, 1
    %s21 = ssub.s32 %s13, %s20
    %p22 = scmp.eq.s32.totalorder %s21, 0
    %s24 = sadd.s32 %s23, 1
    %s25 = scalar_select %p22, %s23, %s24
    %p28 = pneg %p22
    %p29 = scmp.eq.s32.totalorder %s13, 1
    %p30 = por %p28, %p29
    %p31 = scmp.ne.s32.totalorder %s23, %s26
    %p32 = scmp.eq.s32.totalorder %s13, 0
    %p33 = por %p31, %p32
    %p34 = scmp.ne.s32.totalorder %s23, %s26
    %p35 = scmp.eq.s32.totalorder %s18, 1
    %p36 = por %p34, %p35
    %p37 = scmp.ne.s32.totalorder %s26, %s27
    %p38 = scmp.eq.s32.totalorder %s18, 0
    %p39 = por %p37, %p38
    %p40 = scmp.ne.s32.totalorder %s26, %s27
    %p41 = scmp.eq.s32.totalorder %s19, 1
    %p42 = por %p40, %p41
    %p44 = scmp.ne.s32.totalorder %s27, %s43
    %p45 = scmp.eq.s32.totalorder %s19, 0
    %p46 = por %p44, %p45
    %s48 = sadd.s32 %s47, 1
    %p51 = scmp.eq.s32.totalorder %s13, 1
    %p52 = scmp.ne.s32.totalorder %s47, %s49
    %p53 = scmp.eq.s32.totalorder %s13, 0
    %p54 = por %p52, %p53
    %p55 = scmp.ne.s32.totalorder %s47, %s49
    %p56 = scmp.eq.s32.totalorder %s18, 1
    %p57 = por %p55, %p56
    %p58 = scmp.ne.s32.totalorder %s49, %s50
    %p59 = scmp.eq.s32.totalorder %s18, 0
    %p60 = por %p58, %p59
    %p61 = scmp.ne.s32.totalorder %s49, %s50
    %p62 = scmp.eq.s32.totalorder %s19, 1
    %p63 = por %p61, %p62
    %p65 = scmp.ne.s32.totalorder %s50, %s64
    %p66 = scmp.eq.s32.totalorder %s19, 0
    %p67 = por %p65, %p66
    %s69 = sadd.s32 %s68, 1
    %p72 = scmp.eq.s32.totalorder %s13, 1
    %p73 = scmp.ne.s32.totalorder %s68, %s70
    %p74 = scmp.eq.s32.totalorder %s13, 0
    %p75 = por %p73, %p74
    %p76 = scmp.ne.s32.totalorder %s68, %s70
    %p77 = scmp.eq.s32.totalorder %s18, 1
    %p78 = por %p76, %p77
    %p79 = scmp.ne.s32.totalorder %s70, %s71
    %p80 = scmp.eq.s32.totalorder %s18, 0
    %p81 = por %p79, %p80
    %p82 = scmp.ne.s32.totalorder %s70, %s71
    %p83 = scmp.eq.s32.totalorder %s19, 1
    %p84 = por %p82, %p83
    %p86 = scmp.ne.s32.totalorder %s71, %s85
    %p87 = scmp.eq.s32.totalorder %s19, 0
    %p88 = por %p86, %p87
    %s90 = sadd.s32 %s89, 1
    %p93 = scmp.eq.s32.totalorder %s13, 1
    %p94 = scmp.ne.s32.totalorder %s89, %s91
    %p95 = scmp.eq.s32.totalorder %s13, 0
    %p96 = por %p94, %p95
    %p97 = scmp.ne.s32.totalorder %s89, %s91
    %p98 = scmp.eq.s32.totalorder %s18, 1
    %p99 = por %p97, %p98
    %p100 = scmp.ne.s32.totalorder %s91, %s92
    %p101 = scmp.eq.s32.totalorder %s18, 0
    %p102 = por %p100, %p101
    %p103 = scmp.ne.s32.totalorder %s91, %s92
    %p104 = scmp.eq.s32.totalorder %s19, 1
    %p105 = por %p103, %p104
    %p107 = scmp.ne.s32.totalorder %s92, %s106
    %p108 = scmp.eq.s32.totalorder %s19, 0
    %p109 = por %p107, %p108
    %s111 = sadd.s32 %s110, 1
    %p114 = scmp.eq.s32.totalorder %s13, 1
    %p115 = scmp.ne.s32.totalorder %s110, %s112
    %p116 = scmp.eq.s32.totalorder %s13, 0
    %p117 = por %p115, %p116
    %p118 = scmp.ne.s32.totalorder %s110, %s112
    %p119 = scmp.eq.s32.totalorder %s18, 1
    %p120 = por %p118, %p119
    %p121 = scmp.ne.s32.totalorder %s112, %s113
    %p122 = scmp.eq.s32.totalorder %s18, 0
    %p123 = por %p121, %p122
    %p124 = scmp.ne.s32.totalorder %s112, %s113
    %p125 = scmp.eq.s32.totalorder %s19, 1
    %p126 = por %p124, %p125
    %p128 = scmp.ne.s32.totalorder %s113, %s127
    %p129 = scmp.eq.s32.totalorder %s19, 0
    %p130 = por %p128, %p129
    %s132 = sadd.s32 %s131, 1
    %p135 = scmp.eq.s32.totalorder %s13, 1
    %p136 = scmp.ne.s32.totalorder %s131, %s133
    %p137 = scmp.eq.s32.totalorder %s13, 0
    %p138 = por %p136, %p137
    %p139 = scmp.ne.s32.totalorder %s131, %s133
    %p140 = scmp.eq.s32.totalorder %s18, 1
    %p141 = por %p139, %p140
    %p142 = scmp.ne.s32.totalorder %s133, %s134
    %p143 = scmp.eq.s32.totalorder %s18, 0
    %p144 = por %p142, %p143
    %p145 = scmp.ne.s32.totalorder %s133, %s134
    %p146 = scmp.eq.s32.totalorder %s19, 1
    %p147 = por %p145, %p146
    %p149 = scmp.ne.s32.totalorder %s134, %s148
    %p150 = scmp.eq.s32.totalorder %s19, 0
    %p151 = por %p149, %p150
    %s153 = sadd.s32 %s152, 1
    %p156 = scmp.eq.s32.totalorder %s13, 1
    %p157 = scmp.ne.s32.totalorder %s152, %s154
    %p158 = scmp.eq.s32.totalorder %s13, 0
    %p159 = por %p157, %p158
    %p160 = scmp.ne.s32.totalorder %s152, %s154
    %p161 = scmp.eq.s32.totalorder %s18, 1
    %p162 = por %p160, %p161
    %p163 = scmp.ne.s32.totalorder %s154, %s155
    %p164 = scmp.eq.s32.totalorder %s18, 0
    %p165 = por %p163, %p164
    %p166 = scmp.ne.s32.totalorder %s154, %s155
    %p167 = scmp.eq.s32.totalorder %s19, 1
    %p168 = por %p166, %p167
    %p170 = scmp.ne.s32.totalorder %s155, %s169
    %p171 = scmp.eq.s32.totalorder %s19, 0
    %p172 = por %p170, %p171
    %s173 = ssub.s32 %s13, %s20
    %p174 = scmp.eq.s32.totalorder %s173, 0
    %s176 = sadd.s32 %s175, 1
    %s177 = scalar_select %p174, %s175, %s176
    %p180 = pneg %p174
    %p181 = scmp.eq.s32.totalorder %s13, 1
    %p182 = por %p180, %p181
    %p183 = scmp.ne.s32.totalorder %s175, %s178
    %p184 = scmp.eq.s32.totalorder %s13, 0
    %p185 = por %p183, %p184
    %p186 = scmp.ne.s32.totalorder %s175, %s178
    %p187 = scmp.eq.s32.totalorder %s18, 1
    %p188 = por %p186, %p187
    %p189 = scmp.ne.s32.totalorder %s178, %s179
    %p190 = scmp.eq.s32.totalorder %s18, 0
    %p191 = por %p189, %p190
    %p192 = scmp.ne.s32.totalorder %s178, %s179
    %p193 = scmp.eq.s32.totalorder %s19, 1
    %p194 = por %p192, %p193
    %p196 = scmp.ne.s32.totalorder %s179, %s195
    %p197 = scmp.eq.s32.totalorder %s19, 0
    %p198 = por %p196, %p197
    %p199 = scmp.le.s32.totalorder 1, %s13
    %p200 = scmp.lt.s32.totalorder %s13, 3
    %p201 = pnand %p199, %p200
    %p202 = pneg %p201
    // Predicated region
    $region9: #{mnist_2nn_forward.1} parent=5 // pred_check
      _
    $region10: #{mnist_2nn_forward.1} parent=5 // pred_check_branch
      %204 = sbr.rel (%p201) target = $region12
    $region11: #{mnist_2nn_forward.1} parent=5 // pred_region
      %s205 = ssub.s32 %s13, 1
      // Predicated region
      $region13: #{mnist_2nn_forward.1} parent=11 // pred_check
        %p206 = pneg %p60
      $region14: #{mnist_2nn_forward.1} parent=11 // pred_check_branch
        %208 = sbr.rel (%p206) target = $region16
      $region15: #{mnist_2nn_forward.1} parent=11 // pred_region
        _
      $region16: #{mnist_2nn_forward.1} parent=11 // pred_fallthru
        _
      // Predicated region
      $region17: #{mnist_2nn_forward.1} parent=11 // pred_check
        %p209 = pneg %p81
      $region18: #{mnist_2nn_forward.1} parent=11 // pred_check_branch
        %211 = sbr.rel (%p209) target = $region20
      $region19: #{mnist_2nn_forward.1} parent=11 // pred_region
        _
      $region20: #{mnist_2nn_forward.1} parent=11 // pred_fallthru
        _
      // Predicated region
      $region21: #{mnist_2nn_forward.1} parent=11 // pred_check
        %p212 = pneg %p102
      $region22: #{mnist_2nn_forward.1} parent=11 // pred_check_branch
        %214 = sbr.rel (%p212) target = $region24
      $region23: #{mnist_2nn_forward.1} parent=11 // pred_region
        _
      $region24: #{mnist_2nn_forward.1} parent=11 // pred_fallthru
        _
      // Predicated region
      $region25: #{mnist_2nn_forward.1} parent=11 // pred_check
        %p215 = pneg %p123
      $region26: #{mnist_2nn_forward.1} parent=11 // pred_check_branch
        %217 = sbr.rel (%p215) target = $region28
      $region27: #{mnist_2nn_forward.1} parent=11 // pred_region
        _
      $region28: #{mnist_2nn_forward.1} parent=11 // pred_fallthru
        _
      // Predicated region
      $region29: #{mnist_2nn_forward.1} parent=11 // pred_check
        %p218 = pneg %p144
      $region30: #{mnist_2nn_forward.1} parent=11 // pred_check_branch
        %220 = sbr.rel (%p218) target = $region32
      $region31: #{mnist_2nn_forward.1} parent=11 // pred_region
        _
      $region32: #{mnist_2nn_forward.1} parent=11 // pred_fallthru
        _
      // Predicated region
      $region33: #{mnist_2nn_forward.1} parent=11 // pred_check
        %p221 = pneg %p165
      $region34: #{mnist_2nn_forward.1} parent=11 // pred_check_branch
        %223 = sbr.rel (%p221) target = $region36
      $region35: #{mnist_2nn_forward.1} parent=11 // pred_region
        _
      $region36: #{mnist_2nn_forward.1} parent=11 // pred_fallthru
        _
    $region12: #{mnist_2nn_forward.1} parent=5 // pred_fallthru
      _
    %p224 = scmp.lt.s32.totalorder %s13, 2
    // Predicated region
    $region37: #{mnist_2nn_forward.1} parent=5 // pred_check
      %p225 = pneg %p224
    $region38: #{mnist_2nn_forward.1} parent=5 // pred_check_branch
      %227 = sbr.rel (%p225) target = $region40
    $region39: #{mnist_2nn_forward.1} parent=5 // pred_region
      // Predicated region
      $region41: #{mnist_2nn_forward.1} parent=39 // pred_check
        %p228 = pneg %p33
      $region42: #{mnist_2nn_forward.1} parent=39 // pred_check_branch
        %230 = sbr.rel (%p228) target = $region44
      $region43: #{mnist_2nn_forward.1} parent=39 // pred_region
        %s231 = smul.u32 16, %s13
        %p232 = scmp.lt.s32.totalorder %s231, 31
        %s233 = scalar_select %p232, %s231, 31
        %s234 = smul.addr %s233, 7
        %s235 = smul.addr %s234, 4
        %s236 = scalar_lea.vmem %s0, %s235
        %s237 = smul.u32 16, %s13
      $region44: #{mnist_2nn_forward.1} parent=39 // pred_fallthru
        _
    $region40: #{mnist_2nn_forward.1} parent=5 // pred_fallthru
      _
    %p238 = scmp.le.s32.totalorder 1, %s13
    %p239 = scmp.lt.s32.totalorder %s13, 3
    %p240 = pnand %p238, %p239
    %p241 = pneg %p240
    // Predicated region
    $region45: #{mnist_2nn_forward.1} parent=5 // pred_check
      _
    $region46: #{mnist_2nn_forward.1} parent=5 // pred_check_branch
      %243 = sbr.rel (%p240) target = $region48
    $region47: #{mnist_2nn_forward.1} parent=5 // pred_region
      %s244 = ssub.s32 %s13, 1
      %s245 = smul.u32 16, %s18
      %p246 = scmp.lt.s32.totalorder %s245, 31
      %s247 = scalar_select %p246, %s245, 31
      %s248 = smul.addr %s247, 7
      %s249 = smul.addr %s248, 4
      %s250 = scalar_lea.vmem %s0, %s249
      %p251 = pneg %p39
      %p252 = pneg %p36
      %p253 = pneg %p60
      %p254 = pneg %p57
      %p255 = pneg %p81
      %p256 = pneg %p78
      %p257 = pneg %p102
      %p258 = pneg %p99
      %p259 = pneg %p123
      %p260 = pneg %p120
      %p261 = pneg %p144
      %p262 = pneg %p141
      %p263 = pneg %p165
      %p264 = pneg %p162
      %p265 = pneg %p191
      %p266 = pneg %p188
      %s267 = smul.u32 16, %s18
      %p268 = scmp.lt.s32.totalorder %s267, 31
      %s269 = scalar_select %p268, %s267, 31
      %s270 = smul.addr %s269, 8
      %s271 = scalar_lea.vmem %s7, %s270
      %s272 = smul.u32 16, %s18
      %p273 = scmp.lt.s32.totalorder %s272, 31
      %s274 = scalar_select %p273, %s272, 31
      %s275 = smul.addr %s274, 7
      %s276 = smul.addr %s275, 4
      %s277 = scalar_lea.vmem %s0, %s276
      %s278 = smul.u32 16, %s18
      %s279 = smul.u32 16, %s18
      %p280 = scmp.lt.s32.totalorder %s279, 31
      %s281 = scalar_select %p280, %s279, 31
      %s282 = smul.addr %s281, 8
      %s283 = scalar_lea.vmem %s7, %s282
      %s284 = smul.u32 16, %s18
      %v286 = vld [vmem:[%s277] sm:$0xff]
      %v287 = vld [vmem:[%s277 + $0x8] sm:$0xff]
      %v288 = vld [vmem:[%s277 + $0x10] sm:$0xff]
      %v289 = vld [vmem:[%s277 + $0x18] sm:$0xf]
      %v290 = vld [vmem:[%s277 + $0x1c] sm:$0xff]
      %v291 = vld [vmem:[%s277 + $0x24] sm:$0xff]
      %v292 = vld [vmem:[%s277 + $0x2c] sm:$0xff]
      %v293 = vld [vmem:[%s277 + $0x34] sm:$0xf]
      %v294 = vld [vmem:[%s277 + $0x38] sm:$0xff]
      %v295 = vld [vmem:[%s277 + $0x40] sm:$0xff]
      %v296 = vld [vmem:[%s277 + $0x48] sm:$0xff]
      %v297 = vld [vmem:[%s277 + $0x50] sm:$0xf]
      %v298 = vld [vmem:[%s277 + $0x54] sm:$0xff]
      %v299 = vld [vmem:[%s277 + $0x5c] sm:$0xff]
      %v300 = vld [vmem:[%s277 + $0x64] sm:$0xff]
      %v301 = vld [vmem:[%s277 + $0x6c] sm:$0xf]
      %v302 = vld [vmem:[%s277 + $0x70] sm:$0xff]
      %v303 = vld [vmem:[%s277 + $0x78] sm:$0xff]
      %v304 = vld [vmem:[%s277 + $0x80] sm:$0xff]
      %v305 = vld [vmem:[%s277 + $0x88] sm:$0xf]
      %v306 = vld [vmem:[%s277 + $0x8c] sm:$0xff]
      %v307 = vld [vmem:[%s277 + $0x94] sm:$0xff]
      %v308 = vld [vmem:[%s277 + $0x9c] sm:$0xff]
      %v309 = vld [vmem:[%s277 + $0xa4] sm:$0xf]
      %v310 = vld [vmem:[%s277 + $0xa8] sm:$0xff]
      %v311 = vld [vmem:[%s277 + $0xb0] sm:$0xff]
      %v312 = vld [vmem:[%s277 + $0xb8] sm:$0xff]
      %v313 = vld [vmem:[%s277 + $0xc0] sm:$0xf]
      %v314 = vld [vmem:[%s277 + $0xc4] sm:$0xff]
      %v315 = vld [vmem:[%s277 + $0xcc] sm:$0xff]
      %v316 = vld [vmem:[%s277 + $0xd4] sm:$0xff]
      %v317 = vld [vmem:[%s277 + $0xdc] sm:$0xf]
      %v318 = vld [vmem:[%s277 + $0xe0] sm:$0xff]
      %v319 = vld [vmem:[%s277 + $0xe8] sm:$0xff]
      %v320 = vld [vmem:[%s277 + $0xf0] sm:$0xff]
      %v321 = vld [vmem:[%s277 + $0xf8] sm:$0xf]
      %v322 = vld [vmem:[%s277 + $0xfc] sm:$0xff]
      %v323 = vld [vmem:[%s277 + $0x104] sm:$0xff]
      %v324 = vld [vmem:[%s277 + $0x10c] sm:$0xff]
      %v325 = vld [vmem:[%s277 + $0x114] sm:$0xf]
      %v326 = vld [vmem:[%s277 + $0x118] sm:$0xff]
      %v327 = vld [vmem:[%s277 + $0x120] sm:$0xff]
      %v328 = vld [vmem:[%s277 + $0x128] sm:$0xff]
      %v329 = vld [vmem:[%s277 + $0x130] sm:$0xf]
      %v330 = vld [vmem:[%s277 + $0x134] sm:$0xff]
      %v331 = vld [vmem:[%s277 + $0x13c] sm:$0xff]
      %v332 = vld [vmem:[%s277 + $0x144] sm:$0xff]
      %v333 = vld [vmem:[%s277 + $0x14c] sm:$0xf]
      %v334 = vld [vmem:[%s277 + $0x150] sm:$0xff]
      %v335 = vld [vmem:[%s277 + $0x158] sm:$0xff]
      %v336 = vld [vmem:[%s277 + $0x160] sm:$0xff]
      %v337 = vld [vmem:[%s277 + $0x168] sm:$0xf]
      %v338 = vld [vmem:[%s277 + $0x16c] sm:$0xff]
      %v339 = vld [vmem:[%s277 + $0x174] sm:$0xff]
      %v340 = vld [vmem:[%s277 + $0x17c] sm:$0xff]
      %v341 = vld [vmem:[%s277 + $0x184] sm:$0xf]
      %v342 = vld [vmem:[%s277 + $0x188] sm:$0xff]
      %v343 = vld [vmem:[%s277 + $0x190] sm:$0xff]
      %v344 = vld [vmem:[%s277 + $0x198] sm:$0xff]
      %v345 = vld [vmem:[%s277 + $0x1a0] sm:$0xf]
      %v346 = vld [vmem:[%s277 + $0x1a4] sm:$0xff]
      %v347 = vld [vmem:[%s277 + $0x1ac] sm:$0xff]
      %v348 = vld [vmem:[%s277 + $0x1b4] sm:$0xff]
      %v349 = vld [vmem:[%s277 + $0x1bc] sm:$0xf]
      %v350 = vld [vmem:[%s1] sm:$0xff]
      %v351 = vld [vmem:[%s1 + $0x8] sm:$0xff]
      %v352 = vld [vmem:[%s1 + $0x10] sm:$0xff]
      %v353 = vld [vmem:[%s1 + $0x18] sm:$0xff]
      %v354 = vld [vmem:[%s1 + $0x20] sm:$0xff]
      %v355 = vld [vmem:[%s1 + $0x28] sm:$0xff]
      %v356 = vld [vmem:[%s1 + $0x30] sm:$0xff]
      %v357 = vld [vmem:[%s1 + $0x38] sm:$0xff]
      %v358 = vld [vmem:[%s1 + $0x40] sm:$0xff]
      %v359 = vld [vmem:[%s1 + $0x48] sm:$0xff]
      %v360 = vld [vmem:[%s1 + $0x50] sm:$0xff]
      %v361 = vld [vmem:[%s1 + $0x58] sm:$0xff]
      %v362 = vld [vmem:[%s1 + $0x60] sm:$0xff]
      %v363 = vld [vmem:[%s1 + $0x68] sm:$0xff]
      %v364 = vld [vmem:[%s1 + $0x70] sm:$0xff]
      %v365 = vld [vmem:[%s1 + $0x78] sm:$0xff]
      %v366 = vld [vmem:[%s1 + $0x80] sm:$0xff]
      %v367 = vld [vmem:[%s1 + $0x88] sm:$0xff]
      %v368 = vld [vmem:[%s1 + $0x90] sm:$0xff]
      %v369 = vld [vmem:[%s1 + $0x98] sm:$0xff]
      %v370 = vld [vmem:[%s1 + $0xa0] sm:$0xff]
      %v371 = vld [vmem:[%s1 + $0xa8] sm:$0xff]
      %v372 = vld [vmem:[%s1 + $0xb0] sm:$0xff]
      %v373 = vld [vmem:[%s1 + $0xb8] sm:$0xff]
      %v374 = vld [vmem:[%s1 + $0xc0] sm:$0xff]
      %v375 = vld [vmem:[%s1 + $0xc8] sm:$0xff]
      %v376 = vld [vmem:[%s1 + $0xd0] sm:$0xff]
      %v377 = vld [vmem:[%s1 + $0xd8] sm:$0xff]
      %v378 = vld [vmem:[%s1 + $0xe0] sm:$0xff]
      %v379 = vld [vmem:[%s1 + $0xe8] sm:$0xff]
      %v380 = vld [vmem:[%s1 + $0xf0] sm:$0xff]
      %v381 = vld [vmem:[%s1 + $0xf8] sm:$0xff]
      %v382 = vld [vmem:[%s1 + $0x100] sm:$0xff]
      %v383 = vld [vmem:[%s1 + $0x108] sm:$0xff]
      %v384 = vld [vmem:[%s1 + $0x110] sm:$0xff]
      %v385 = vld [vmem:[%s1 + $0x118] sm:$0xff]
      %v386 = vld [vmem:[%s1 + $0x120] sm:$0xff]
      %v387 = vld [vmem:[%s1 + $0x128] sm:$0xff]
      %v388 = vld [vmem:[%s1 + $0x130] sm:$0xff]
      %v389 = vld [vmem:[%s1 + $0x138] sm:$0xff]
      %v390 = vld [vmem:[%s1 + $0x140] sm:$0xff]
      %v391 = vld [vmem:[%s1 + $0x148] sm:$0xff]
      %v392 = vld [vmem:[%s1 + $0x150] sm:$0xff]
      %v393 = vld [vmem:[%s1 + $0x158] sm:$0xff]
      %v394 = vld [vmem:[%s1 + $0x160] sm:$0xff]
      %v395 = vld [vmem:[%s1 + $0x168] sm:$0xff]
      %v396 = vld [vmem:[%s1 + $0x170] sm:$0xff]
      %v397 = vld [vmem:[%s1 + $0x178] sm:$0xff]
      %v398 = vld [vmem:[%s1 + $0x180] sm:$0xff]
      %v399 = vld [vmem:[%s1 + $0x188] sm:$0xff]
      %v400 = vld [vmem:[%s1 + $0x190] sm:$0xff]
      %v401 = vld [vmem:[%s1 + $0x198] sm:$0xff]
      %v402 = vld [vmem:[%s1 + $0x1a0] sm:$0xff]
      %v403 = vld [vmem:[%s1 + $0x1a8] sm:$0xff]
      %v404 = vld [vmem:[%s1 + $0x1b0] sm:$0xff]
      %v405 = vld [vmem:[%s1 + $0x1b8] sm:$0xff]
      %v406 = vld [vmem:[%s1 + $0x1c0] sm:$0xff]
      %v407 = vld [vmem:[%s1 + $0x1c8] sm:$0xff]
      %v408 = vld [vmem:[%s1 + $0x1d0] sm:$0xff]
      %v409 = vld [vmem:[%s1 + $0x1d8] sm:$0xff]
      %v410 = vld [vmem:[%s1 + $0x1e0] sm:$0xff]
      %v411 = vld [vmem:[%s1 + $0x1e8] sm:$0xff]
      %v412 = vld [vmem:[%s1 + $0x1f0] sm:$0xff]
      %v413 = vld [vmem:[%s1 + $0x1f8] sm:$0xff]
      %v414 = vld [vmem:[%s1 + $0x200] sm:$0xff]
      %v415 = vld [vmem:[%s1 + $0x208] sm:$0xff]
      %v416 = vld [vmem:[%s1 + $0x210] sm:$0xff]
      %v417 = vld [vmem:[%s1 + $0x218] sm:$0xff]
      %v418 = vld [vmem:[%s1 + $0x220] sm:$0xff]
      %v419 = vld [vmem:[%s1 + $0x228] sm:$0xff]
      %v420 = vld [vmem:[%s1 + $0x230] sm:$0xff]
      %v421 = vld [vmem:[%s1 + $0x238] sm:$0xff]
      %v422 = vld [vmem:[%s1 + $0x240] sm:$0xff]
      %v423 = vld [vmem:[%s1 + $0x248] sm:$0xff]
      %v424 = vld [vmem:[%s1 + $0x250] sm:$0xff]
      %v425 = vld [vmem:[%s1 + $0x258] sm:$0xff]
      %v426 = vld [vmem:[%s1 + $0x260] sm:$0xff]
      %v427 = vld [vmem:[%s1 + $0x268] sm:$0xff]
      %v428 = vld [vmem:[%s1 + $0x270] sm:$0xff]
      %v429 = vld [vmem:[%s1 + $0x278] sm:$0xff]
      %v430 = vld [vmem:[%s1 + $0x280] sm:$0xff]
      %v431 = vld [vmem:[%s1 + $0x288] sm:$0xff]
      %v432 = vld [vmem:[%s1 + $0x290] sm:$0xff]
      %v433 = vld [vmem:[%s1 + $0x298] sm:$0xff]
      %v434 = vld [vmem:[%s1 + $0x2a0] sm:$0xff]
      %v435 = vld [vmem:[%s1 + $0x2a8] sm:$0xff]
      %v436 = vld [vmem:[%s1 + $0x2b0] sm:$0xff]
      %v437 = vld [vmem:[%s1 + $0x2b8] sm:$0xff]
      %v438 = vld [vmem:[%s1 + $0x2c0] sm:$0xff]
      %v439 = vld [vmem:[%s1 + $0x2c8] sm:$0xff]
      %v440 = vld [vmem:[%s1 + $0x2d0] sm:$0xff]
      %v441 = vld [vmem:[%s1 + $0x2d8] sm:$0xff]
      %v442 = vld [vmem:[%s1 + $0x2e0] sm:$0xff]
      %v443 = vld [vmem:[%s1 + $0x2e8] sm:$0xff]
      %v444 = vld [vmem:[%s1 + $0x2f0] sm:$0xff]
      %v445 = vld [vmem:[%s1 + $0x2f8] sm:$0xff]
      %v446 = vld [vmem:[%s1 + $0x300] sm:$0xff]
      %v447 = vld [vmem:[%s1 + $0x308] sm:$0xff]
      %v448 = vld [vmem:[%s2] sm:$0x3]
      %v450 = vperm.slane %v448, 0
      %v451 = vperm.slane %v448, 1
      %v518 = vunpack.c.l.b16 %v286
      %v519 = vunpack.c.h.b16 %v286
      %v520 = vunpack.c.l.b16 %v287
      %v521 = vunpack.c.h.b16 %v287
      %v522 = vunpack.c.l.b16 %v288
      %v523 = vunpack.c.h.b16 %v288
      %v524 = vunpack.c.l.b16 %v289
      %v525 = vunpack.c.l.b16 %v290
      %v526 = vunpack.c.h.b16 %v290
      %v527 = vunpack.c.l.b16 %v291
      %v528 = vunpack.c.h.b16 %v291
      %v529 = vunpack.c.l.b16 %v292
      %v530 = vunpack.c.h.b16 %v292
      %v531 = vunpack.c.l.b16 %v293
      %v532 = vunpack.c.l.b16 %v294
      %v533 = vunpack.c.h.b16 %v294
      %v534 = vunpack.c.l.b16 %v295
      %v535 = vunpack.c.h.b16 %v295
      %v536 = vunpack.c.l.b16 %v296
      %v537 = vunpack.c.h.b16 %v296
      %v538 = vunpack.c.l.b16 %v297
      %v539 = vunpack.c.l.b16 %v298
      %v540 = vunpack.c.h.b16 %v298
      %v541 = vunpack.c.l.b16 %v299
      %v542 = vunpack.c.h.b16 %v299
      %v543 = vunpack.c.l.b16 %v300
      %v544 = vunpack.c.h.b16 %v300
      %v545 = vunpack.c.l.b16 %v301
      %v546 = vunpack.c.l.b16 %v302
      %v547 = vunpack.c.h.b16 %v302
      %v548 = vunpack.c.l.b16 %v303
      %v549 = vunpack.c.h.b16 %v303
      %v550 = vunpack.c.l.b16 %v304
      %v551 = vunpack.c.h.b16 %v304
      %v552 = vunpack.c.l.b16 %v305
      %v553 = vunpack.c.l.b16 %v306
      %v554 = vunpack.c.h.b16 %v306
      %v555 = vunpack.c.l.b16 %v307
      %v556 = vunpack.c.h.b16 %v307
      %v557 = vunpack.c.l.b16 %v308
      %v558 = vunpack.c.h.b16 %v308
      %v559 = vunpack.c.l.b16 %v309
      %v560 = vunpack.c.l.b16 %v310
      %v561 = vunpack.c.h.b16 %v310
      %v562 = vunpack.c.l.b16 %v311
      %v563 = vunpack.c.h.b16 %v311
      %v564 = vunpack.c.l.b16 %v312
      %v565 = vunpack.c.h.b16 %v312
      %v566 = vunpack.c.l.b16 %v313
      %v567 = vunpack.c.l.b16 %v314
      %v568 = vunpack.c.h.b16 %v314
      %v569 = vunpack.c.l.b16 %v315
      %v570 = vunpack.c.h.b16 %v315
      %v571 = vunpack.c.l.b16 %v316
      %v572 = vunpack.c.h.b16 %v316
      %v573 = vunpack.c.l.b16 %v317
      %v574 = vunpack.c.l.b16 %v318
      %v575 = vunpack.c.h.b16 %v318
      %v576 = vunpack.c.l.b16 %v319
      %v577 = vunpack.c.h.b16 %v319
      %v578 = vunpack.c.l.b16 %v320
      %v579 = vunpack.c.h.b16 %v320
      %v580 = vunpack.c.l.b16 %v321
      %v581 = vunpack.c.l.b16 %v322
      %v582 = vunpack.c.h.b16 %v322
      %v583 = vunpack.c.l.b16 %v323
      %v584 = vunpack.c.h.b16 %v323
      %v585 = vunpack.c.l.b16 %v324
      %v586 = vunpack.c.h.b16 %v324
      %v587 = vunpack.c.l.b16 %v325
      %v588 = vunpack.c.l.b16 %v326
      %v589 = vunpack.c.h.b16 %v326
      %v590 = vunpack.c.l.b16 %v327
      %v591 = vunpack.c.h.b16 %v327
      %v592 = vunpack.c.l.b16 %v328
      %v593 = vunpack.c.h.b16 %v328
      %v594 = vunpack.c.l.b16 %v329
      %v595 = vunpack.c.l.b16 %v330
      %v596 = vunpack.c.h.b16 %v330
      %v597 = vunpack.c.l.b16 %v331
      %v598 = vunpack.c.h.b16 %v331
      %v599 = vunpack.c.l.b16 %v332
      %v600 = vunpack.c.h.b16 %v332
      %v601 = vunpack.c.l.b16 %v333
      %v602 = vunpack.c.l.b16 %v334
      %v603 = vunpack.c.h.b16 %v334
      %v604 = vunpack.c.l.b16 %v335
      %v605 = vunpack.c.h.b16 %v335
      %v606 = vunpack.c.l.b16 %v336
      %v607 = vunpack.c.h.b16 %v336
      %v608 = vunpack.c.l.b16 %v337
      %v609 = vunpack.c.l.b16 %v338
      %v610 = vunpack.c.h.b16 %v338
      %v611 = vunpack.c.l.b16 %v339
      %v612 = vunpack.c.h.b16 %v339
      %v613 = vunpack.c.l.b16 %v340
      %v614 = vunpack.c.h.b16 %v340
      %v615 = vunpack.c.l.b16 %v341
      %v616 = vunpack.c.l.b16 %v342
      %v617 = vunpack.c.h.b16 %v342
      %v618 = vunpack.c.l.b16 %v343
      %v619 = vunpack.c.h.b16 %v343
      %v620 = vunpack.c.l.b16 %v344
      %v621 = vunpack.c.h.b16 %v344
      %v622 = vunpack.c.l.b16 %v345
      %v623 = vunpack.c.l.b16 %v346
      %v624 = vunpack.c.h.b16 %v346
      %v625 = vunpack.c.l.b16 %v347
      %v626 = vunpack.c.h.b16 %v347
      %v627 = vunpack.c.l.b16 %v348
      %v628 = vunpack.c.h.b16 %v348
      %v629 = vunpack.c.l.b16 %v349
      %v630 = vpack.c.b16 %v525, %v518
      %v631 = vpack.c.b16 %v526, %v519
      %v632 = vpack.c.b16 %v527, %v520
      %v633 = vpack.c.b16 %v528, %v521
      %v634 = vpack.c.b16 %v529, %v522
      %v635 = vpack.c.b16 %v530, %v523
      %v636 = vpack.c.b16 %v531, %v524
      %v637 = vpack.c.b16 %v539, %v532
      %v638 = vpack.c.b16 %v540, %v533
      %v639 = vpack.c.b16 %v541, %v534
      %v640 = vpack.c.b16 %v542, %v535
      %v641 = vpack.c.b16 %v543, %v536
      %v642 = vpack.c.b16 %v544, %v537
      %v643 = vpack.c.b16 %v545, %v538
      %v644 = vpack.c.b16 %v553, %v546
      %v645 = vpack.c.b16 %v554, %v547
      %v646 = vpack.c.b16 %v555, %v548
      %v647 = vpack.c.b16 %v556, %v549
      %v648 = vpack.c.b16 %v557, %v550
      %v649 = vpack.c.b16 %v558, %v551
      %v650 = vpack.c.b16 %v559, %v552
      %v651 = vpack.c.b16 %v567, %v560
      %v652 = vpack.c.b16 %v568, %v561
      %v653 = vpack.c.b16 %v569, %v562
      %v654 = vpack.c.b16 %v570, %v563
      %v655 = vpack.c.b16 %v571, %v564
      %v656 = vpack.c.b16 %v572, %v565
      %v657 = vpack.c.b16 %v573, %v566
      %v658 = vpack.c.b16 %v581, %v574
      %v659 = vpack.c.b16 %v582, %v575
      %v660 = vpack.c.b16 %v583, %v576
      %v661 = vpack.c.b16 %v584, %v577
      %v662 = vpack.c.b16 %v585, %v578
      %v663 = vpack.c.b16 %v586, %v579
      %v664 = vpack.c.b16 %v587, %v580
      %v665 = vpack.c.b16 %v595, %v588
      %v666 = vpack.c.b16 %v596, %v589
      %v667 = vpack.c.b16 %v597, %v590
      %v668 = vpack.c.b16 %v598, %v591
      %v669 = vpack.c.b16 %v599, %v592
      %v670 = vpack.c.b16 %v600, %v593
      %v671 = vpack.c.b16 %v601, %v594
      %v672 = vpack.c.b16 %v609, %v602
      %v673 = vpack.c.b16 %v610, %v603
      %v674 = vpack.c.b16 %v611, %v604
      %v675 = vpack.c.b16 %v612, %v605
      %v676 = vpack.c.b16 %v613, %v606
      %v677 = vpack.c.b16 %v614, %v607
      %v678 = vpack.c.b16 %v615, %v608
      %v679 = vpack.c.b16 %v623, %v616
      %v680 = vpack.c.b16 %v624, %v617
      %v681 = vpack.c.b16 %v625, %v618
      %v682 = vpack.c.b16 %v626, %v619
      %v683 = vpack.c.b16 %v627, %v620
      %v684 = vpack.c.b16 %v628, %v621
      %v685 = vpack.c.b16 %v629, %v622
      %v832 = vunpack.c.l.b16 %v350
      %v833 = vunpack.c.h.b16 %v350
      %v834 = vunpack.c.l.b16 %v351
      %v835 = vunpack.c.h.b16 %v351
      %v836 = vunpack.c.l.b16 %v352
      %v837 = vunpack.c.h.b16 %v352
      %v838 = vunpack.c.l.b16 %v353
      %v839 = vunpack.c.h.b16 %v353
      %v840 = vunpack.c.l.b16 %v354
      %v841 = vunpack.c.h.b16 %v354
      %v842 = vunpack.c.l.b16 %v355
      %v843 = vunpack.c.h.b16 %v355
      %v844 = vunpack.c.l.b16 %v356
      %v845 = vunpack.c.h.b16 %v356
      %v846 = vunpack.c.l.b16 %v357
      %v847 = vunpack.c.h.b16 %v357
      %v848 = vunpack.c.l.b16 %v358
      %v849 = vunpack.c.h.b16 %v358
      %v850 = vunpack.c.l.b16 %v359
      %v851 = vunpack.c.h.b16 %v359
      %v852 = vunpack.c.l.b16 %v360
      %v853 = vunpack.c.h.b16 %v360
      %v854 = vunpack.c.l.b16 %v361
      %v855 = vunpack.c.h.b16 %v361
      %v856 = vunpack.c.l.b16 %v362
      %v857 = vunpack.c.h.b16 %v362
      %v858 = vunpack.c.l.b16 %v363
      %v859 = vunpack.c.h.b16 %v363
      %v860 = vunpack.c.l.b16 %v364
      %v861 = vunpack.c.h.b16 %v364
      %v862 = vunpack.c.l.b16 %v365
      %v863 = vunpack.c.h.b16 %v365
      %v864 = vunpack.c.l.b16 %v366
      %v865 = vunpack.c.h.b16 %v366
      %v866 = vunpack.c.l.b16 %v367
      %v867 = vunpack.c.h.b16 %v367
      %v868 = vunpack.c.l.b16 %v368
      %v869 = vunpack.c.h.b16 %v368
      %v870 = vunpack.c.l.b16 %v369
      %v871 = vunpack.c.h.b16 %v369
      %v872 = vunpack.c.l.b16 %v370
      %v873 = vunpack.c.h.b16 %v370
      %v874 = vunpack.c.l.b16 %v371
      %v875 = vunpack.c.h.b16 %v371
      %v876 = vunpack.c.l.b16 %v372
      %v877 = vunpack.c.h.b16 %v372
      %v878 = vunpack.c.l.b16 %v373
      %v879 = vunpack.c.h.b16 %v373
      %v880 = vunpack.c.l.b16 %v374
      %v881 = vunpack.c.h.b16 %v374
      %v882 = vunpack.c.l.b16 %v375
      %v883 = vunpack.c.h.b16 %v375
      %v884 = vunpack.c.l.b16 %v376
      %v885 = vunpack.c.h.b16 %v376
      %v886 = vunpack.c.l.b16 %v377
      %v887 = vunpack.c.h.b16 %v377
      %v888 = vunpack.c.l.b16 %v378
      %v889 = vunpack.c.h.b16 %v378
      %v890 = vunpack.c.l.b16 %v379
      %v891 = vunpack.c.h.b16 %v379
      %v892 = vunpack.c.l.b16 %v380
      %v893 = vunpack.c.h.b16 %v380
      %v894 = vunpack.c.l.b16 %v381
      %v895 = vunpack.c.h.b16 %v381
      %v896 = vunpack.c.l.b16 %v382
      %v897 = vunpack.c.h.b16 %v382
      %v898 = vunpack.c.l.b16 %v383
      %v899 = vunpack.c.h.b16 %v383
      %v900 = vunpack.c.l.b16 %v384
      %v901 = vunpack.c.h.b16 %v384
      %v902 = vunpack.c.l.b16 %v385
      %v903 = vunpack.c.h.b16 %v385
      %v904 = vunpack.c.l.b16 %v386
      %v905 = vunpack.c.h.b16 %v386
      %v906 = vunpack.c.l.b16 %v387
      %v907 = vunpack.c.h.b16 %v387
      %v908 = vunpack.c.l.b16 %v388
      %v909 = vunpack.c.h.b16 %v388
      %v910 = vunpack.c.l.b16 %v389
      %v911 = vunpack.c.h.b16 %v389
      %v912 = vunpack.c.l.b16 %v390
      %v913 = vunpack.c.h.b16 %v390
      %v914 = vunpack.c.l.b16 %v391
      %v915 = vunpack.c.h.b16 %v391
      %v916 = vunpack.c.l.b16 %v392
      %v917 = vunpack.c.h.b16 %v392
      %v918 = vunpack.c.l.b16 %v393
      %v919 = vunpack.c.h.b16 %v393
      %v920 = vunpack.c.l.b16 %v394
      %v921 = vunpack.c.h.b16 %v394
      %v922 = vunpack.c.l.b16 %v395
      %v923 = vunpack.c.h.b16 %v395
      %v924 = vunpack.c.l.b16 %v396
      %v925 = vunpack.c.h.b16 %v396
      %v926 = vunpack.c.l.b16 %v397
      %v927 = vunpack.c.h.b16 %v397
      %v928 = vunpack.c.l.b16 %v398
      %v929 = vunpack.c.h.b16 %v398
      %v930 = vunpack.c.l.b16 %v399
      %v931 = vunpack.c.h.b16 %v399
      %v932 = vunpack.c.l.b16 %v400
      %v933 = vunpack.c.h.b16 %v400
      %v934 = vunpack.c.l.b16 %v401
      %v935 = vunpack.c.h.b16 %v401
      %v936 = vunpack.c.l.b16 %v402
      %v937 = vunpack.c.h.b16 %v402
      %v938 = vunpack.c.l.b16 %v403
      %v939 = vunpack.c.h.b16 %v403
      %v940 = vunpack.c.l.b16 %v404
      %v941 = vunpack.c.h.b16 %v404
      %v942 = vunpack.c.l.b16 %v405
      %v943 = vunpack.c.h.b16 %v405
      %v944 = vunpack.c.l.b16 %v406
      %v945 = vunpack.c.h.b16 %v406
      %v946 = vunpack.c.l.b16 %v407
      %v947 = vunpack.c.h.b16 %v407
      %v948 = vunpack.c.l.b16 %v408
      %v949 = vunpack.c.h.b16 %v408
      %v950 = vunpack.c.l.b16 %v409
      %v951 = vunpack.c.h.b16 %v409
      %v952 = vunpack.c.l.b16 %v410
      %v953 = vunpack.c.h.b16 %v410
      %v954 = vunpack.c.l.b16 %v411
      %v955 = vunpack.c.h.b16 %v411
      %v956 = vunpack.c.l.b16 %v412
      %v957 = vunpack.c.h.b16 %v412
      %v958 = vunpack.c.l.b16 %v413
      %v959 = vunpack.c.h.b16 %v413
      %v960 = vunpack.c.l.b16 %v414
      %v961 = vunpack.c.h.b16 %v414
      %v962 = vunpack.c.l.b16 %v415
      %v963 = vunpack.c.h.b16 %v415
      %v964 = vunpack.c.l.b16 %v416
      %v965 = vunpack.c.h.b16 %v416
      %v966 = vunpack.c.l.b16 %v417
      %v967 = vunpack.c.h.b16 %v417
      %v968 = vunpack.c.l.b16 %v418
      %v969 = vunpack.c.h.b16 %v418
      %v970 = vunpack.c.l.b16 %v419
      %v971 = vunpack.c.h.b16 %v419
      %v972 = vunpack.c.l.b16 %v420
      %v973 = vunpack.c.h.b16 %v420
      %v974 = vunpack.c.l.b16 %v421
      %v975 = vunpack.c.h.b16 %v421
      %v976 = vunpack.c.l.b16 %v422
      %v977 = vunpack.c.h.b16 %v422
      %v978 = vunpack.c.l.b16 %v423
      %v979 = vunpack.c.h.b16 %v423
      %v980 = vunpack.c.l.b16 %v424
      %v981 = vunpack.c.h.b16 %v424
      %v982 = vunpack.c.l.b16 %v425
      %v983 = vunpack.c.h.b16 %v425
      %v984 = vunpack.c.l.b16 %v426
      %v985 = vunpack.c.h.b16 %v426
      %v986 = vunpack.c.l.b16 %v427
      %v987 = vunpack.c.h.b16 %v427
      %v988 = vunpack.c.l.b16 %v428
      %v989 = vunpack.c.h.b16 %v428
      %v990 = vunpack.c.l.b16 %v429
      %v991 = vunpack.c.h.b16 %v429
      %v992 = vunpack.c.l.b16 %v430
      %v993 = vunpack.c.h.b16 %v430
      %v994 = vunpack.c.l.b16 %v431
      %v995 = vunpack.c.h.b16 %v431
      %v996 = vunpack.c.l.b16 %v432
      %v997 = vunpack.c.h.b16 %v432
      %v998 = vunpack.c.l.b16 %v433
      %v999 = vunpack.c.h.b16 %v433
      %v1000 = vunpack.c.l.b16 %v434
      %v1001 = vunpack.c.h.b16 %v434
      %v1002 = vunpack.c.l.b16 %v435
      %v1003 = vunpack.c.h.b16 %v435
      %v1004 = vunpack.c.l.b16 %v436
      %v1005 = vunpack.c.h.b16 %v436
      %v1006 = vunpack.c.l.b16 %v437
      %v1007 = vunpack.c.h.b16 %v437
      %v1008 = vunpack.c.l.b16 %v438
      %v1009 = vunpack.c.h.b16 %v438
      %v1010 = vunpack.c.l.b16 %v439
      %v1011 = vunpack.c.h.b16 %v439
      %v1012 = vunpack.c.l.b16 %v440
      %v1013 = vunpack.c.h.b16 %v440
      %v1014 = vunpack.c.l.b16 %v441
      %v1015 = vunpack.c.h.b16 %v441
      %v1016 = vunpack.c.l.b16 %v442
      %v1017 = vunpack.c.h.b16 %v442
      %v1018 = vunpack.c.l.b16 %v443
      %v1019 = vunpack.c.h.b16 %v443
      %v1020 = vunpack.c.l.b16 %v444
      %v1021 = vunpack.c.h.b16 %v444
      %v1022 = vunpack.c.l.b16 %v445
      %v1023 = vunpack.c.h.b16 %v445
      %v1024 = vunpack.c.l.b16 %v446
      %v1025 = vunpack.c.h.b16 %v446
      %v1026 = vunpack.c.l.b16 %v447
      %v1027 = vunpack.c.h.b16 %v447
      %v1028 = vpack.c.b16 %v834, %v832
      %v1029 = vpack.c.b16 %v835, %v833
      %v1030 = vpack.c.b16 %v838, %v836
      %v1031 = vpack.c.b16 %v839, %v837
      %v1032 = vpack.c.b16 %v842, %v840
      %v1033 = vpack.c.b16 %v843, %v841
      %v1034 = vpack.c.b16 %v846, %v844
      %v1035 = vpack.c.b16 %v847, %v845
      %v1036 = vpack.c.b16 %v850, %v848
      %v1037 = vpack.c.b16 %v851, %v849
      %v1038 = vpack.c.b16 %v854, %v852
      %v1039 = vpack.c.b16 %v855, %v853
      %v1040 = vpack.c.b16 %v858, %v856
      %v1041 = vpack.c.b16 %v859, %v857
      %v1042 = vpack.c.b16 %v862, %v860
      %v1043 = vpack.c.b16 %v863, %v861
      %v1044 = vpack.c.b16 %v866, %v864
      %v1045 = vpack.c.b16 %v867, %v865
      %v1046 = vpack.c.b16 %v870, %v868
      %v1047 = vpack.c.b16 %v871, %v869
      %v1048 = vpack.c.b16 %v874, %v872
      %v1049 = vpack.c.b16 %v875, %v873
      %v1050 = vpack.c.b16 %v878, %v876
      %v1051 = vpack.c.b16 %v879, %v877
      %v1052 = vpack.c.b16 %v882, %v880
      %v1053 = vpack.c.b16 %v883, %v881
      %v1054 = vpack.c.b16 %v886, %v884
      %v1055 = vpack.c.b16 %v887, %v885
      %v1056 = vpack.c.b16 %v890, %v888
      %v1057 = vpack.c.b16 %v891, %v889
      %v1058 = vpack.c.b16 %v894, %v892
      %v1059 = vpack.c.b16 %v895, %v893
      %v1060 = vpack.c.b16 %v898, %v896
      %v1061 = vpack.c.b16 %v899, %v897
      %v1062 = vpack.c.b16 %v902, %v900
      %v1063 = vpack.c.b16 %v903, %v901
      %v1064 = vpack.c.b16 %v906, %v904
      %v1065 = vpack.c.b16 %v907, %v905
      %v1066 = vpack.c.b16 %v910, %v908
      %v1067 = vpack.c.b16 %v911, %v909
      %v1068 = vpack.c.b16 %v914, %v912
      %v1069 = vpack.c.b16 %v915, %v913
      %v1070 = vpack.c.b16 %v918, %v916
      %v1071 = vpack.c.b16 %v919, %v917
      %v1072 = vpack.c.b16 %v922, %v920
      %v1073 = vpack.c.b16 %v923, %v921
      %v1074 = vpack.c.b16 %v926, %v924
      %v1075 = vpack.c.b16 %v927, %v925
      %v1076 = vpack.c.b16 %v930, %v928
      %v1077 = vpack.c.b16 %v931, %v929
      %v1078 = vpack.c.b16 %v934, %v932
      %v1079 = vpack.c.b16 %v935, %v933
      %v1080 = vpack.c.b16 %v938, %v936
      %v1081 = vpack.c.b16 %v939, %v937
      %v1082 = vpack.c.b16 %v942, %v940
      %v1083 = vpack.c.b16 %v943, %v941
      %v1084 = vpack.c.b16 %v946, %v944
      %v1085 = vpack.c.b16 %v947, %v945
      %v1086 = vpack.c.b16 %v950, %v948
      %v1087 = vpack.c.b16 %v951, %v949
      %v1088 = vpack.c.b16 %v954, %v952
      %v1089 = vpack.c.b16 %v955, %v953
      %v1090 = vpack.c.b16 %v958, %v956
      %v1091 = vpack.c.b16 %v959, %v957
      %v1092 = vpack.c.b16 %v962, %v960
      %v1093 = vpack.c.b16 %v963, %v961
      %v1094 = vpack.c.b16 %v966, %v964
      %v1095 = vpack.c.b16 %v967, %v965
      %v1096 = vpack.c.b16 %v970, %v968
      %v1097 = vpack.c.b16 %v971, %v969
      %v1098 = vpack.c.b16 %v974, %v972
      %v1099 = vpack.c.b16 %v975, %v973
      %v1100 = vpack.c.b16 %v978, %v976
      %v1101 = vpack.c.b16 %v979, %v977
      %v1102 = vpack.c.b16 %v982, %v980
      %v1103 = vpack.c.b16 %v983, %v981
      %v1104 = vpack.c.b16 %v986, %v984
      %v1105 = vpack.c.b16 %v987, %v985
      %v1106 = vpack.c.b16 %v990, %v988
      %v1107 = vpack.c.b16 %v991, %v989
      %v1108 = vpack.c.b16 %v994, %v992
      %v1109 = vpack.c.b16 %v995, %v993
      %v1110 = vpack.c.b16 %v998, %v996
      %v1111 = vpack.c.b16 %v999, %v997
      %v1112 = vpack.c.b16 %v1002, %v1000
      %v1113 = vpack.c.b16 %v1003, %v1001
      %v1114 = vpack.c.b16 %v1006, %v1004
      %v1115 = vpack.c.b16 %v1007, %v1005
      %v1116 = vpack.c.b16 %v1010, %v1008
      %v1117 = vpack.c.b16 %v1011, %v1009
      %v1118 = vpack.c.b16 %v1014, %v1012
      %v1119 = vpack.c.b16 %v1015, %v1013
      %v1120 = vpack.c.b16 %v1018, %v1016
      %v1121 = vpack.c.b16 %v1019, %v1017
      %v1122 = vpack.c.b16 %v1022, %v1020
      %v1123 = vpack.c.b16 %v1023, %v1021
      %v1124 = vpack.c.b16 %v1026, %v1024
      %v1125 = vpack.c.b16 %v1027, %v1025
      %vm1224 = vcmask 130048
      %v1226 = vsel %vm1224, %v636, 0
      %v1229 = vsel %vm1224, %v643, 0
      %v1232 = vsel %vm1224, %v650, 0
      %v1235 = vsel %vm1224, %v657, 0
      %v1238 = vsel %vm1224, %v664, 0
      %v1241 = vsel %vm1224, %v671, 0
      %v1244 = vsel %vm1224, %v678, 0
      %v1247 = vsel %vm1224, %v685, 0
      %1249 = vmatpush.bf16.msra.mxu0 %v1042
      %1250 = vmatpush.bf16.msra.mxu0 %v1040
      %1251 = vmatpush.bf16.msra.mxu0 %v1038
      %1252 = vmatpush.bf16.msra.mxu0 %v1036
      %1253 = vmatpush.bf16.msra.mxu0 %v1034
      %1254 = vmatpush.bf16.msra.mxu0 %v1032
      %1255 = vmatpush.bf16.msra.mxu0 %v1030
      %1256 = vmatpush.bf16.msra.mxu0 %v1028
      %1257 = vmatmul.bf16.gmra.mxu0 %v630
      %v1258 = vpop.f32.mrf.mxu0
      %v1259 = vadd.f32 %v450, %v1258
      %v1260 = vpop.f32.mrf.mxu0
      %v1261 = vadd.f32 %v450, %v1260
      %1262 = vmatmul.bf16.gmra.mxu0 %v637
      %v1263 = vpop.f32.mrf.mxu0
      %v1264 = vadd.f32 %v450, %v1263
      %v1265 = vpop.f32.mrf.mxu0
      %v1266 = vadd.f32 %v450, %v1265
      %1267 = vmatmul.bf16.gmra.mxu0 %v644
      %v1268 = vpop.f32.mrf.mxu0
      %v1269 = vadd.f32 %v450, %v1268
      %v1270 = vpop.f32.mrf.mxu0
      %v1271 = vadd.f32 %v450, %v1270
      %1272 = vmatmul.bf16.gmra.mxu0 %v651
      %v1273 = vpop.f32.mrf.mxu0
      %v1274 = vadd.f32 %v450, %v1273
      %v1275 = vpop.f32.mrf.mxu0
      %v1276 = vadd.f32 %v450, %v1275
      %1277 = vmatmul.bf16.gmra.mxu0 %v658
      %v1278 = vpop.f32.mrf.mxu0
      %v1279 = vadd.f32 %v450, %v1278
      %v1280 = vpop.f32.mrf.mxu0
      %v1281 = vadd.f32 %v450, %v1280
      %1282 = vmatmul.bf16.gmra.mxu0 %v665
      %v1283 = vpop.f32.mrf.mxu0
      %v1284 = vadd.f32 %v450, %v1283
      %v1285 = vpop.f32.mrf.mxu0
      %v1286 = vadd.f32 %v450, %v1285
      %1287 = vmatmul.bf16.gmra.mxu0 %v672
      %v1288 = vpop.f32.mrf.mxu0
      %v1289 = vadd.f32 %v450, %v1288
      %v1290 = vpop.f32.mrf.mxu0
      %v1291 = vadd.f32 %v450, %v1290
      %1292 = vmatmul.bf16.gmra.mxu0 %v679
      %v1293 = vpop.f32.mrf.mxu0
      %v1294 = vadd.f32 %v450, %v1293
      %v1295 = vpop.f32.mrf.mxu0
      %v1296 = vadd.f32 %v450, %v1295
      %1297 = vdwg.mxu0
      %1298 = vmatpush.bf16.msra.mxu0 %v1058
      %1299 = vmatpush.bf16.msra.mxu0 %v1056
      %1300 = vmatpush.bf16.msra.mxu0 %v1054
      %1301 = vmatpush.bf16.msra.mxu0 %v1052
      %1302 = vmatpush.bf16.msra.mxu0 %v1050
      %1303 = vmatpush.bf16.msra.mxu0 %v1048
      %1304 = vmatpush.bf16.msra.mxu0 %v1046
      %1305 = vmatpush.bf16.msra.mxu0 %v1044
      %1306 = vmatmul.bf16.gmra.mxu0 %v631
      %v1307 = vpop.f32.mrf.mxu0
      %v1308 = vadd.f32 %v1259, %v1307
      %v1309 = vpop.f32.mrf.mxu0
      %v1310 = vadd.f32 %v1261, %v1309
      %1311 = vmatmul.bf16.gmra.mxu0 %v638
      %v1312 = vpop.f32.mrf.mxu0
      %v1313 = vadd.f32 %v1264, %v1312
      %v1314 = vpop.f32.mrf.mxu0
      %v1315 = vadd.f32 %v1266, %v1314
      %1316 = vmatmul.bf16.gmra.mxu0 %v645
      %v1317 = vpop.f32.mrf.mxu0
      %v1318 = vadd.f32 %v1269, %v1317
      %v1319 = vpop.f32.mrf.mxu0
      %v1320 = vadd.f32 %v1271, %v1319
      %1321 = vmatmul.bf16.gmra.mxu0 %v652
      %v1322 = vpop.f32.mrf.mxu0
      %v1323 = vadd.f32 %v1274, %v1322
      %v1324 = vpop.f32.mrf.mxu0
      %v1325 = vadd.f32 %v1276, %v1324
      %1326 = vmatmul.bf16.gmra.mxu0 %v659
      %v1327 = vpop.f32.mrf.mxu0
      %v1328 = vadd.f32 %v1279, %v1327
      %v1329 = vpop.f32.mrf.mxu0
      %v1330 = vadd.f32 %v1281, %v1329
      %1331 = vmatmul.bf16.gmra.mxu0 %v666
      %v1332 = vpop.f32.mrf.mxu0
      %v1333 = vadd.f32 %v1284, %v1332
      %v1334 = vpop.f32.mrf.mxu0
      %v1335 = vadd.f32 %v1286, %v1334
      %1336 = vmatmul.bf16.gmra.mxu0 %v673
      %v1337 = vpop.f32.mrf.mxu0
      %v1338 = vadd.f32 %v1289, %v1337
      %v1339 = vpop.f32.mrf.mxu0
      %v1340 = vadd.f32 %v1291, %v1339
      %1341 = vmatmul.bf16.gmra.mxu0 %v680
      %v1342 = vpop.f32.mrf.mxu0
      %v1343 = vadd.f32 %v1294, %v1342
      %v1344 = vpop.f32.mrf.mxu0
      %v1345 = vadd.f32 %v1296, %v1344
      %1346 = vdwg.mxu0
      %1347 = vmatpush.bf16.msra.mxu0 %v1074
      %1348 = vmatpush.bf16.msra.mxu0 %v1072
      %1349 = vmatpush.bf16.msra.mxu0 %v1070
      %1350 = vmatpush.bf16.msra.mxu0 %v1068
      %1351 = vmatpush.bf16.msra.mxu0 %v1066
      %1352 = vmatpush.bf16.msra.mxu0 %v1064
      %1353 = vmatpush.bf16.msra.mxu0 %v1062
      %1354 = vmatpush.bf16.msra.mxu0 %v1060
      %1355 = vmatmul.bf16.gmra.mxu0 %v632
      %v1356 = vpop.f32.mrf.mxu0
      %v1357 = vadd.f32 %v1308, %v1356
      %v1358 = vpop.f32.mrf.mxu0
      %v1359 = vadd.f32 %v1310, %v1358
      %1360 = vmatmul.bf16.gmra.mxu0 %v639
      %v1361 = vpop.f32.mrf.mxu0
      %v1362 = vadd.f32 %v1313, %v1361
      %v1363 = vpop.f32.mrf.mxu0
      %v1364 = vadd.f32 %v1315, %v1363
      %1365 = vmatmul.bf16.gmra.mxu0 %v646
      %v1366 = vpop.f32.mrf.mxu0
      %v1367 = vadd.f32 %v1318, %v1366
      %v1368 = vpop.f32.mrf.mxu0
      %v1369 = vadd.f32 %v1320, %v1368
      %1370 = vmatmul.bf16.gmra.mxu0 %v653
      %v1371 = vpop.f32.mrf.mxu0
      %v1372 = vadd.f32 %v1323, %v1371
      %v1373 = vpop.f32.mrf.mxu0
      %v1374 = vadd.f32 %v1325, %v1373
      %1375 = vmatmul.bf16.gmra.mxu0 %v660
      %v1376 = vpop.f32.mrf.mxu0
      %v1377 = vadd.f32 %v1328, %v1376
      %v1378 = vpop.f32.mrf.mxu0
      %v1379 = vadd.f32 %v1330, %v1378
      %1380 = vmatmul.bf16.gmra.mxu0 %v667
      %v1381 = vpop.f32.mrf.mxu0
      %v1382 = vadd.f32 %v1333, %v1381
      %v1383 = vpop.f32.mrf.mxu0
      %v1384 = vadd.f32 %v1335, %v1383
      %1385 = vmatmul.bf16.gmra.mxu0 %v674
      %v1386 = vpop.f32.mrf.mxu0
      %v1387 = vadd.f32 %v1338, %v1386
      %v1388 = vpop.f32.mrf.mxu0
      %v1389 = vadd.f32 %v1340, %v1388
      %1390 = vmatmul.bf16.gmra.mxu0 %v681
      %v1391 = vpop.f32.mrf.mxu0
      %v1392 = vadd.f32 %v1343, %v1391
      %v1393 = vpop.f32.mrf.mxu0
      %v1394 = vadd.f32 %v1345, %v1393
      %1395 = vdwg.mxu0
      %1396 = vmatpush.bf16.msra.mxu0 %v1090
      %1397 = vmatpush.bf16.msra.mxu0 %v1088
      %1398 = vmatpush.bf16.msra.mxu0 %v1086
      %1399 = vmatpush.bf16.msra.mxu0 %v1084
      %1400 = vmatpush.bf16.msra.mxu0 %v1082
      %1401 = vmatpush.bf16.msra.mxu0 %v1080
      %1402 = vmatpush.bf16.msra.mxu0 %v1078
      %1403 = vmatpush.bf16.msra.mxu0 %v1076
      %1404 = vmatmul.bf16.gmra.mxu0 %v633
      %v1405 = vpop.f32.mrf.mxu0
      %v1406 = vadd.f32 %v1357, %v1405
      %v1407 = vpop.f32.mrf.mxu0
      %v1408 = vadd.f32 %v1359, %v1407
      %1409 = vmatmul.bf16.gmra.mxu0 %v640
      %v1410 = vpop.f32.mrf.mxu0
      %v1411 = vadd.f32 %v1362, %v1410
      %v1412 = vpop.f32.mrf.mxu0
      %v1413 = vadd.f32 %v1364, %v1412
      %1414 = vmatmul.bf16.gmra.mxu0 %v647
      %v1415 = vpop.f32.mrf.mxu0
      %v1416 = vadd.f32 %v1367, %v1415
      %v1417 = vpop.f32.mrf.mxu0
      %v1418 = vadd.f32 %v1369, %v1417
      %1419 = vmatmul.bf16.gmra.mxu0 %v654
      %v1420 = vpop.f32.mrf.mxu0
      %v1421 = vadd.f32 %v1372, %v1420
      %v1422 = vpop.f32.mrf.mxu0
      %v1423 = vadd.f32 %v1374, %v1422
      %1424 = vmatmul.bf16.gmra.mxu0 %v661
      %v1425 = vpop.f32.mrf.mxu0
      %v1426 = vadd.f32 %v1377, %v1425
      %v1427 = vpop.f32.mrf.mxu0
      %v1428 = vadd.f32 %v1379, %v1427
      %1429 = vmatmul.bf16.gmra.mxu0 %v668
      %v1430 = vpop.f32.mrf.mxu0
      %v1431 = vadd.f32 %v1382, %v1430
      %v1432 = vpop.f32.mrf.mxu0
      %v1433 = vadd.f32 %v1384, %v1432
      %1434 = vmatmul.bf16.gmra.mxu0 %v675
      %v1435 = vpop.f32.mrf.mxu0
      %v1436 = vadd.f32 %v1387, %v1435
      %v1437 = vpop.f32.mrf.mxu0
      %v1438 = vadd.f32 %v1389, %v1437
      %1439 = vmatmul.bf16.gmra.mxu0 %v682
      %v1440 = vpop.f32.mrf.mxu0
      %v1441 = vadd.f32 %v1392, %v1440
      %v1442 = vpop.f32.mrf.mxu0
      %v1443 = vadd.f32 %v1394, %v1442
      %1444 = vdwg.mxu0
      %1445 = vmatpush.bf16.msra.mxu0 %v1106
      %1446 = vmatpush.bf16.msra.mxu0 %v1104
      %1447 = vmatpush.bf16.msra.mxu0 %v1102
      %1448 = vmatpush.bf16.msra.mxu0 %v1100
      %1449 = vmatpush.bf16.msra.mxu0 %v1098
      %1450 = vmatpush.bf16.msra.mxu0 %v1096
      %1451 = vmatpush.bf16.msra.mxu0 %v1094
      %1452 = vmatpush.bf16.msra.mxu0 %v1092
      %1453 = vmatmul.bf16.gmra.mxu0 %v634
      %v1454 = vpop.f32.mrf.mxu0
      %v1455 = vadd.f32 %v1406, %v1454
      %v1456 = vpop.f32.mrf.mxu0
      %v1457 = vadd.f32 %v1408, %v1456
      %1458 = vmatmul.bf16.gmra.mxu0 %v641
      %v1459 = vpop.f32.mrf.mxu0
      %v1460 = vadd.f32 %v1411, %v1459
      %v1461 = vpop.f32.mrf.mxu0
      %v1462 = vadd.f32 %v1413, %v1461
      %1463 = vmatmul.bf16.gmra.mxu0 %v648
      %v1464 = vpop.f32.mrf.mxu0
      %v1465 = vadd.f32 %v1416, %v1464
      %v1466 = vpop.f32.mrf.mxu0
      %v1467 = vadd.f32 %v1418, %v1466
      %1468 = vmatmul.bf16.gmra.mxu0 %v655
      %v1469 = vpop.f32.mrf.mxu0
      %v1470 = vadd.f32 %v1421, %v1469
      %v1471 = vpop.f32.mrf.mxu0
      %v1472 = vadd.f32 %v1423, %v1471
      %1473 = vmatmul.bf16.gmra.mxu0 %v662
      %v1474 = vpop.f32.mrf.mxu0
      %v1475 = vadd.f32 %v1426, %v1474
      %v1476 = vpop.f32.mrf.mxu0
      %v1477 = vadd.f32 %v1428, %v1476
      %1478 = vmatmul.bf16.gmra.mxu0 %v669
      %v1479 = vpop.f32.mrf.mxu0
      %v1480 = vadd.f32 %v1431, %v1479
      %v1481 = vpop.f32.mrf.mxu0
      %v1482 = vadd.f32 %v1433, %v1481
      %1483 = vmatmul.bf16.gmra.mxu0 %v676
      %v1484 = vpop.f32.mrf.mxu0
      %v1485 = vadd.f32 %v1436, %v1484
      %v1486 = vpop.f32.mrf.mxu0
      %v1487 = vadd.f32 %v1438, %v1486
      %1488 = vmatmul.bf16.gmra.mxu0 %v683
      %v1489 = vpop.f32.mrf.mxu0
      %v1490 = vadd.f32 %v1441, %v1489
      %v1491 = vpop.f32.mrf.mxu0
      %v1492 = vadd.f32 %v1443, %v1491
      %1493 = vdwg.mxu0
      %1494 = vmatpush.bf16.msra.mxu0 %v1122
      %1495 = vmatpush.bf16.msra.mxu0 %v1120
      %1496 = vmatpush.bf16.msra.mxu0 %v1118
      %1497 = vmatpush.bf16.msra.mxu0 %v1116
      %1498 = vmatpush.bf16.msra.mxu0 %v1114
      %1499 = vmatpush.bf16.msra.mxu0 %v1112
      %1500 = vmatpush.bf16.msra.mxu0 %v1110
      %1501 = vmatpush.bf16.msra.mxu0 %v1108
      %1502 = vmatmul.bf16.gmra.mxu0 %v635
      %v1503 = vpop.f32.mrf.mxu0
      %v1504 = vadd.f32 %v1455, %v1503
      %v1505 = vpop.f32.mrf.mxu0
      %v1506 = vadd.f32 %v1457, %v1505
      %1507 = vmatmul.bf16.gmra.mxu0 %v642
      %v1508 = vpop.f32.mrf.mxu0
      %v1509 = vadd.f32 %v1460, %v1508
      %v1510 = vpop.f32.mrf.mxu0
      %v1511 = vadd.f32 %v1462, %v1510
      %1512 = vmatmul.bf16.gmra.mxu0 %v649
      %v1513 = vpop.f32.mrf.mxu0
      %v1514 = vadd.f32 %v1465, %v1513
      %v1515 = vpop.f32.mrf.mxu0
      %v1516 = vadd.f32 %v1467, %v1515
      %1517 = vmatmul.bf16.gmra.mxu0 %v656
      %v1518 = vpop.f32.mrf.mxu0
      %v1519 = vadd.f32 %v1470, %v1518
      %v1520 = vpop.f32.mrf.mxu0
      %v1521 = vadd.f32 %v1472, %v1520
      %1522 = vmatmul.bf16.gmra.mxu0 %v663
      %v1523 = vpop.f32.mrf.mxu0
      %v1524 = vadd.f32 %v1475, %v1523
      %v1525 = vpop.f32.mrf.mxu0
      %v1526 = vadd.f32 %v1477, %v1525
      %1527 = vmatmul.bf16.gmra.mxu0 %v670
      %v1528 = vpop.f32.mrf.mxu0
      %v1529 = vadd.f32 %v1480, %v1528
      %v1530 = vpop.f32.mrf.mxu0
      %v1531 = vadd.f32 %v1482, %v1530
      %1532 = vmatmul.bf16.gmra.mxu0 %v677
      %v1533 = vpop.f32.mrf.mxu0
      %v1534 = vadd.f32 %v1485, %v1533
      %v1535 = vpop.f32.mrf.mxu0
      %v1536 = vadd.f32 %v1487, %v1535
      %1537 = vmatmul.bf16.gmra.mxu0 %v684
      %v1538 = vpop.f32.mrf.mxu0
      %v1539 = vadd.f32 %v1490, %v1538
      %v1540 = vpop.f32.mrf.mxu0
      %v1541 = vadd.f32 %v1492, %v1540
      %1542 = vdwg.mxu0
      %1543 = vmatpush.bf16.msra.mxu0 0
      %1544 = vmatpush.bf16.msra.mxu0 0
      %1545 = vmatpush.bf16.msra.mxu0 0
      %1546 = vmatpush.bf16.msra.mxu0 0
      %1547 = vmatpush.bf16.msra.mxu0 0
      %1548 = vmatpush.bf16.msra.mxu0 0
      %1549 = vmatpush.bf16.msra.mxu0 0
      %1550 = vmatpush.bf16.msra.mxu0 %v1124
      %1551 = vmatmul.bf16.gmra.mxu0 %v1226
      %v1552 = vpop.f32.mrf.mxu0
      %v1553 = vadd.f32 %v1504, %v1552
      %v1554 = vpop.f32.mrf.mxu0
      %v1555 = vadd.f32 %v1506, %v1554
      %1556 = vmatmul.bf16.gmra.mxu0 %v1229
      %v1557 = vpop.f32.mrf.mxu0
      %v1558 = vadd.f32 %v1509, %v1557
      %v1559 = vpop.f32.mrf.mxu0
      %v1560 = vadd.f32 %v1511, %v1559
      %1561 = vmatmul.bf16.gmra.mxu0 %v1232
      %v1562 = vpop.f32.mrf.mxu0
      %v1563 = vadd.f32 %v1514, %v1562
      %v1564 = vpop.f32.mrf.mxu0
      %v1565 = vadd.f32 %v1516, %v1564
      %1566 = vmatmul.bf16.gmra.mxu0 %v1235
      %v1567 = vpop.f32.mrf.mxu0
      %v1568 = vadd.f32 %v1519, %v1567
      %v1569 = vpop.f32.mrf.mxu0
      %v1570 = vadd.f32 %v1521, %v1569
      %1571 = vmatmul.bf16.gmra.mxu0 %v1238
      %v1572 = vpop.f32.mrf.mxu0
      %v1573 = vadd.f32 %v1524, %v1572
      %v1574 = vpop.f32.mrf.mxu0
      %v1575 = vadd.f32 %v1526, %v1574
      %1576 = vmatmul.bf16.gmra.mxu0 %v1241
      %v1577 = vpop.f32.mrf.mxu0
      %v1578 = vadd.f32 %v1529, %v1577
      %v1579 = vpop.f32.mrf.mxu0
      %v1580 = vadd.f32 %v1531, %v1579
      %1581 = vmatmul.bf16.gmra.mxu0 %v1244
      %v1582 = vpop.f32.mrf.mxu0
      %v1583 = vadd.f32 %v1534, %v1582
      %v1584 = vpop.f32.mrf.mxu0
      %v1585 = vadd.f32 %v1536, %v1584
      %1586 = vmatmul.bf16.gmra.mxu0 %v1247
      %v1587 = vpop.f32.mrf.mxu0
      %v1588 = vadd.f32 %v1539, %v1587
      %v1589 = vpop.f32.mrf.mxu0
      %v1590 = vadd.f32 %v1541, %v1589
      %1591 = vdwg.mxu0
      %1592 = vmatpush.bf16.msra.mxu0 %v1043
      %1593 = vmatpush.bf16.msra.mxu0 %v1041
      %1594 = vmatpush.bf16.msra.mxu0 %v1039
      %1595 = vmatpush.bf16.msra.mxu0 %v1037
      %1596 = vmatpush.bf16.msra.mxu0 %v1035
      %1597 = vmatpush.bf16.msra.mxu0 %v1033
      %1598 = vmatpush.bf16.msra.mxu0 %v1031
      %1599 = vmatpush.bf16.msra.mxu0 %v1029
      %1600 = vmatmul.bf16.gmra.mxu0 %v630
      %v1601 = vpop.f32.mrf.mxu0
      %v1602 = vadd.f32 %v451, %v1601
      %v1603 = vpop.f32.mrf.mxu0
      %v1604 = vadd.f32 %v451, %v1603
      %1605 = vmatmul.bf16.gmra.mxu0 %v637
      %v1606 = vpop.f32.mrf.mxu0
      %v1607 = vadd.f32 %v451, %v1606
      %v1608 = vpop.f32.mrf.mxu0
      %v1609 = vadd.f32 %v451, %v1608
      %1610 = vmatmul.bf16.gmra.mxu0 %v644
      %v1611 = vpop.f32.mrf.mxu0
      %v1612 = vadd.f32 %v451, %v1611
      %v1613 = vpop.f32.mrf.mxu0
      %v1614 = vadd.f32 %v451, %v1613
      %1615 = vmatmul.bf16.gmra.mxu0 %v651
      %v1616 = vpop.f32.mrf.mxu0
      %v1617 = vadd.f32 %v451, %v1616
      %v1618 = vpop.f32.mrf.mxu0
      %v1619 = vadd.f32 %v451, %v1618
      %1620 = vmatmul.bf16.gmra.mxu0 %v658
      %v1621 = vpop.f32.mrf.mxu0
      %v1622 = vadd.f32 %v451, %v1621
      %v1623 = vpop.f32.mrf.mxu0
      %v1624 = vadd.f32 %v451, %v1623
      %1625 = vmatmul.bf16.gmra.mxu0 %v665
      %v1626 = vpop.f32.mrf.mxu0
      %v1627 = vadd.f32 %v451, %v1626
      %v1628 = vpop.f32.mrf.mxu0
      %v1629 = vadd.f32 %v451, %v1628
      %1630 = vmatmul.bf16.gmra.mxu0 %v672
      %v1631 = vpop.f32.mrf.mxu0
      %v1632 = vadd.f32 %v451, %v1631
      %v1633 = vpop.f32.mrf.mxu0
      %v1634 = vadd.f32 %v451, %v1633
      %1635 = vmatmul.bf16.gmra.mxu0 %v679
      %v1636 = vpop.f32.mrf.mxu0
      %v1637 = vadd.f32 %v451, %v1636
      %v1638 = vpop.f32.mrf.mxu0
      %v1639 = vadd.f32 %v451, %v1638
      %1640 = vdwg.mxu0
      %1641 = vmatpush.bf16.msra.mxu0 %v1059
      %1642 = vmatpush.bf16.msra.mxu0 %v1057
      %1643 = vmatpush.bf16.msra.mxu0 %v1055
      %1644 = vmatpush.bf16.msra.mxu0 %v1053
      %1645 = vmatpush.bf16.msra.mxu0 %v1051
      %1646 = vmatpush.bf16.msra.mxu0 %v1049
      %1647 = vmatpush.bf16.msra.mxu0 %v1047
      %1648 = vmatpush.bf16.msra.mxu0 %v1045
      %1649 = vmatmul.bf16.gmra.mxu0 %v631
      %v1650 = vpop.f32.mrf.mxu0
      %v1651 = vadd.f32 %v1602, %v1650
      %v1652 = vpop.f32.mrf.mxu0
      %v1653 = vadd.f32 %v1604, %v1652
      %1654 = vmatmul.bf16.gmra.mxu0 %v638
      %v1655 = vpop.f32.mrf.mxu0
      %v1656 = vadd.f32 %v1607, %v1655
      %v1657 = vpop.f32.mrf.mxu0
      %v1658 = vadd.f32 %v1609, %v1657
      %1659 = vmatmul.bf16.gmra.mxu0 %v645
      %v1660 = vpop.f32.mrf.mxu0
      %v1661 = vadd.f32 %v1612, %v1660
      %v1662 = vpop.f32.mrf.mxu0
      %v1663 = vadd.f32 %v1614, %v1662
      %1664 = vmatmul.bf16.gmra.mxu0 %v652
      %v1665 = vpop.f32.mrf.mxu0
      %v1666 = vadd.f32 %v1617, %v1665
      %v1667 = vpop.f32.mrf.mxu0
      %v1668 = vadd.f32 %v1619, %v1667
      %1669 = vmatmul.bf16.gmra.mxu0 %v659
      %v1670 = vpop.f32.mrf.mxu0
      %v1671 = vadd.f32 %v1622, %v1670
      %v1672 = vpop.f32.mrf.mxu0
      %v1673 = vadd.f32 %v1624, %v1672
      %1674 = vmatmul.bf16.gmra.mxu0 %v666
      %v1675 = vpop.f32.mrf.mxu0
      %v1676 = vadd.f32 %v1627, %v1675
      %v1677 = vpop.f32.mrf.mxu0
      %v1678 = vadd.f32 %v1629, %v1677
      %1679 = vmatmul.bf16.gmra.mxu0 %v673
      %v1680 = vpop.f32.mrf.mxu0
      %v1681 = vadd.f32 %v1632, %v1680
      %v1682 = vpop.f32.mrf.mxu0
      %v1683 = vadd.f32 %v1634, %v1682
      %1684 = vmatmul.bf16.gmra.mxu0 %v680
      %v1685 = vpop.f32.mrf.mxu0
      %v1686 = vadd.f32 %v1637, %v1685
      %v1687 = vpop.f32.mrf.mxu0
      %v1688 = vadd.f32 %v1639, %v1687
      %1689 = vdwg.mxu0
      %1690 = vmatpush.bf16.msra.mxu0 %v1075
      %1691 = vmatpush.bf16.msra.mxu0 %v1073
      %1692 = vmatpush.bf16.msra.mxu0 %v1071
      %1693 = vmatpush.bf16.msra.mxu0 %v1069
      %1694 = vmatpush.bf16.msra.mxu0 %v1067
      %1695 = vmatpush.bf16.msra.mxu0 %v1065
      %1696 = vmatpush.bf16.msra.mxu0 %v1063
      %1697 = vmatpush.bf16.msra.mxu0 %v1061
      %1698 = vmatmul.bf16.gmra.mxu0 %v632
      %v1699 = vpop.f32.mrf.mxu0
      %v1700 = vadd.f32 %v1651, %v1699
      %v1701 = vpop.f32.mrf.mxu0
      %v1702 = vadd.f32 %v1653, %v1701
      %1703 = vmatmul.bf16.gmra.mxu0 %v639
      %v1704 = vpop.f32.mrf.mxu0
      %v1705 = vadd.f32 %v1656, %v1704
      %v1706 = vpop.f32.mrf.mxu0
      %v1707 = vadd.f32 %v1658, %v1706
      %1708 = vmatmul.bf16.gmra.mxu0 %v646
      %v1709 = vpop.f32.mrf.mxu0
      %v1710 = vadd.f32 %v1661, %v1709
      %v1711 = vpop.f32.mrf.mxu0
      %v1712 = vadd.f32 %v1663, %v1711
      %1713 = vmatmul.bf16.gmra.mxu0 %v653
      %v1714 = vpop.f32.mrf.mxu0
      %v1715 = vadd.f32 %v1666, %v1714
      %v1716 = vpop.f32.mrf.mxu0
      %v1717 = vadd.f32 %v1668, %v1716
      %1718 = vmatmul.bf16.gmra.mxu0 %v660
      %v1719 = vpop.f32.mrf.mxu0
      %v1720 = vadd.f32 %v1671, %v1719
      %v1721 = vpop.f32.mrf.mxu0
      %v1722 = vadd.f32 %v1673, %v1721
      %1723 = vmatmul.bf16.gmra.mxu0 %v667
      %v1724 = vpop.f32.mrf.mxu0
      %v1725 = vadd.f32 %v1676, %v1724
      %v1726 = vpop.f32.mrf.mxu0
      %v1727 = vadd.f32 %v1678, %v1726
      %1728 = vmatmul.bf16.gmra.mxu0 %v674
      %v1729 = vpop.f32.mrf.mxu0
      %v1730 = vadd.f32 %v1681, %v1729
      %v1731 = vpop.f32.mrf.mxu0
      %v1732 = vadd.f32 %v1683, %v1731
      %1733 = vmatmul.bf16.gmra.mxu0 %v681
      %v1734 = vpop.f32.mrf.mxu0
      %v1735 = vadd.f32 %v1686, %v1734
      %v1736 = vpop.f32.mrf.mxu0
      %v1737 = vadd.f32 %v1688, %v1736
      %1738 = vdwg.mxu0
      %1739 = vmatpush.bf16.msra.mxu0 %v1091
      %1740 = vmatpush.bf16.msra.mxu0 %v1089
      %1741 = vmatpush.bf16.msra.mxu0 %v1087
      %1742 = vmatpush.bf16.msra.mxu0 %v1085
      %1743 = vmatpush.bf16.msra.mxu0 %v1083
      %1744 = vmatpush.bf16.msra.mxu0 %v1081
      %1745 = vmatpush.bf16.msra.mxu0 %v1079
      %1746 = vmatpush.bf16.msra.mxu0 %v1077
      %1747 = vmatmul.bf16.gmra.mxu0 %v633
      %v1748 = vpop.f32.mrf.mxu0
      %v1749 = vadd.f32 %v1700, %v1748
      %v1750 = vpop.f32.mrf.mxu0
      %v1751 = vadd.f32 %v1702, %v1750
      %1752 = vmatmul.bf16.gmra.mxu0 %v640
      %v1753 = vpop.f32.mrf.mxu0
      %v1754 = vadd.f32 %v1705, %v1753
      %v1755 = vpop.f32.mrf.mxu0
      %v1756 = vadd.f32 %v1707, %v1755
      %1757 = vmatmul.bf16.gmra.mxu0 %v647
      %v1758 = vpop.f32.mrf.mxu0
      %v1759 = vadd.f32 %v1710, %v1758
      %v1760 = vpop.f32.mrf.mxu0
      %v1761 = vadd.f32 %v1712, %v1760
      %1762 = vmatmul.bf16.gmra.mxu0 %v654
      %v1763 = vpop.f32.mrf.mxu0
      %v1764 = vadd.f32 %v1715, %v1763
      %v1765 = vpop.f32.mrf.mxu0
      %v1766 = vadd.f32 %v1717, %v1765
      %1767 = vmatmul.bf16.gmra.mxu0 %v661
      %v1768 = vpop.f32.mrf.mxu0
      %v1769 = vadd.f32 %v1720, %v1768
      %v1770 = vpop.f32.mrf.mxu0
      %v1771 = vadd.f32 %v1722, %v1770
      %1772 = vmatmul.bf16.gmra.mxu0 %v668
      %v1773 = vpop.f32.mrf.mxu0
      %v1774 = vadd.f32 %v1725, %v1773
      %v1775 = vpop.f32.mrf.mxu0
      %v1776 = vadd.f32 %v1727, %v1775
      %1777 = vmatmul.bf16.gmra.mxu0 %v675
      %v1778 = vpop.f32.mrf.mxu0
      %v1779 = vadd.f32 %v1730, %v1778
      %v1780 = vpop.f32.mrf.mxu0
      %v1781 = vadd.f32 %v1732, %v1780
      %1782 = vmatmul.bf16.gmra.mxu0 %v682
      %v1783 = vpop.f32.mrf.mxu0
      %v1784 = vadd.f32 %v1735, %v1783
      %v1785 = vpop.f32.mrf.mxu0
      %v1786 = vadd.f32 %v1737, %v1785
      %1787 = vdwg.mxu0
      %1788 = vmatpush.bf16.msra.mxu0 %v1107
      %1789 = vmatpush.bf16.msra.mxu0 %v1105
      %1790 = vmatpush.bf16.msra.mxu0 %v1103
      %1791 = vmatpush.bf16.msra.mxu0 %v1101
      %1792 = vmatpush.bf16.msra.mxu0 %v1099
      %1793 = vmatpush.bf16.msra.mxu0 %v1097
      %1794 = vmatpush.bf16.msra.mxu0 %v1095
      %1795 = vmatpush.bf16.msra.mxu0 %v1093
      %1796 = vmatmul.bf16.gmra.mxu0 %v634
      %v1797 = vpop.f32.mrf.mxu0
      %v1798 = vadd.f32 %v1749, %v1797
      %v1799 = vpop.f32.mrf.mxu0
      %v1800 = vadd.f32 %v1751, %v1799
      %1801 = vmatmul.bf16.gmra.mxu0 %v641
      %v1802 = vpop.f32.mrf.mxu0
      %v1803 = vadd.f32 %v1754, %v1802
      %v1804 = vpop.f32.mrf.mxu0
      %v1805 = vadd.f32 %v1756, %v1804
      %1806 = vmatmul.bf16.gmra.mxu0 %v648
      %v1807 = vpop.f32.mrf.mxu0
      %v1808 = vadd.f32 %v1759, %v1807
      %v1809 = vpop.f32.mrf.mxu0
      %v1810 = vadd.f32 %v1761, %v1809
      %1811 = vmatmul.bf16.gmra.mxu0 %v655
      %v1812 = vpop.f32.mrf.mxu0
      %v1813 = vadd.f32 %v1764, %v1812
      %v1814 = vpop.f32.mrf.mxu0
      %v1815 = vadd.f32 %v1766, %v1814
      %1816 = vmatmul.bf16.gmra.mxu0 %v662
      %v1817 = vpop.f32.mrf.mxu0
      %v1818 = vadd.f32 %v1769, %v1817
      %v1819 = vpop.f32.mrf.mxu0
      %v1820 = vadd.f32 %v1771, %v1819
      %1821 = vmatmul.bf16.gmra.mxu0 %v669
      %v1822 = vpop.f32.mrf.mxu0
      %v1823 = vadd.f32 %v1774, %v1822
      %v1824 = vpop.f32.mrf.mxu0
      %v1825 = vadd.f32 %v1776, %v1824
      %1826 = vmatmul.bf16.gmra.mxu0 %v676
      %v1827 = vpop.f32.mrf.mxu0
      %v1828 = vadd.f32 %v1779, %v1827
      %v1829 = vpop.f32.mrf.mxu0
      %v1830 = vadd.f32 %v1781, %v1829
      %1831 = vmatmul.bf16.gmra.mxu0 %v683
      %v1832 = vpop.f32.mrf.mxu0
      %v1833 = vadd.f32 %v1784, %v1832
      %v1834 = vpop.f32.mrf.mxu0
      %v1835 = vadd.f32 %v1786, %v1834
      %1836 = vdwg.mxu0
      %1837 = vmatpush.bf16.msra.mxu0 %v1123
      %1838 = vmatpush.bf16.msra.mxu0 %v1121
      %1839 = vmatpush.bf16.msra.mxu0 %v1119
      %1840 = vmatpush.bf16.msra.mxu0 %v1117
      %1841 = vmatpush.bf16.msra.mxu0 %v1115
      %1842 = vmatpush.bf16.msra.mxu0 %v1113
      %1843 = vmatpush.bf16.msra.mxu0 %v1111
      %1844 = vmatpush.bf16.msra.mxu0 %v1109
      %1845 = vmatmul.bf16.gmra.mxu0 %v635
      %v1846 = vpop.f32.mrf.mxu0
      %v1847 = vadd.f32 %v1798, %v1846
      %v1848 = vpop.f32.mrf.mxu0
      %v1849 = vadd.f32 %v1800, %v1848
      %1850 = vmatmul.bf16.gmra.mxu0 %v642
      %v1851 = vpop.f32.mrf.mxu0
      %v1852 = vadd.f32 %v1803, %v1851
      %v1853 = vpop.f32.mrf.mxu0
      %v1854 = vadd.f32 %v1805, %v1853
      %1855 = vmatmul.bf16.gmra.mxu0 %v649
      %v1856 = vpop.f32.mrf.mxu0
      %v1857 = vadd.f32 %v1808, %v1856
      %v1858 = vpop.f32.mrf.mxu0
      %v1859 = vadd.f32 %v1810, %v1858
      %1860 = vmatmul.bf16.gmra.mxu0 %v656
      %v1861 = vpop.f32.mrf.mxu0
      %v1862 = vadd.f32 %v1813, %v1861
      %v1863 = vpop.f32.mrf.mxu0
      %v1864 = vadd.f32 %v1815, %v1863
      %1865 = vmatmul.bf16.gmra.mxu0 %v663
      %v1866 = vpop.f32.mrf.mxu0
      %v1867 = vadd.f32 %v1818, %v1866
      %v1868 = vpop.f32.mrf.mxu0
      %v1869 = vadd.f32 %v1820, %v1868
      %1870 = vmatmul.bf16.gmra.mxu0 %v670
      %v1871 = vpop.f32.mrf.mxu0
      %v1872 = vadd.f32 %v1823, %v1871
      %v1873 = vpop.f32.mrf.mxu0
      %v1874 = vadd.f32 %v1825, %v1873
      %1875 = vmatmul.bf16.gmra.mxu0 %v677
      %v1876 = vpop.f32.mrf.mxu0
      %v1877 = vadd.f32 %v1828, %v1876
      %v1878 = vpop.f32.mrf.mxu0
      %v1879 = vadd.f32 %v1830, %v1878
      %1880 = vmatmul.bf16.gmra.mxu0 %v684
      %v1881 = vpop.f32.mrf.mxu0
      %v1882 = vadd.f32 %v1833, %v1881
      %v1883 = vpop.f32.mrf.mxu0
      %v1884 = vadd.f32 %v1835, %v1883
      %1885 = vdwg.mxu0
      %1886 = vmatpush.bf16.msra.mxu0 0
      %1887 = vmatpush.bf16.msra.mxu0 0
      %1888 = vmatpush.bf16.msra.mxu0 0
      %1889 = vmatpush.bf16.msra.mxu0 0
      %1890 = vmatpush.bf16.msra.mxu0 0
      %1891 = vmatpush.bf16.msra.mxu0 0
      %1892 = vmatpush.bf16.msra.mxu0 0
      %1893 = vmatpush.bf16.msra.mxu0 %v1125
      %1894 = vmatmul.bf16.gmra.mxu0 %v1226
      %v1895 = vpop.f32.mrf.mxu0
      %v1896 = vadd.f32 %v1847, %v1895
      %v1897 = vpop.f32.mrf.mxu0
      %v1898 = vadd.f32 %v1849, %v1897
      %1899 = vmatmul.bf16.gmra.mxu0 %v1229
      %v1900 = vpop.f32.mrf.mxu0
      %v1901 = vadd.f32 %v1852, %v1900
      %v1902 = vpop.f32.mrf.mxu0
      %v1903 = vadd.f32 %v1854, %v1902
      %1904 = vmatmul.bf16.gmra.mxu0 %v1232
      %v1905 = vpop.f32.mrf.mxu0
      %v1906 = vadd.f32 %v1857, %v1905
      %v1907 = vpop.f32.mrf.mxu0
      %v1908 = vadd.f32 %v1859, %v1907
      %1909 = vmatmul.bf16.gmra.mxu0 %v1235
      %v1910 = vpop.f32.mrf.mxu0
      %v1911 = vadd.f32 %v1862, %v1910
      %v1912 = vpop.f32.mrf.mxu0
      %v1913 = vadd.f32 %v1864, %v1912
      %1914 = vmatmul.bf16.gmra.mxu0 %v1238
      %v1915 = vpop.f32.mrf.mxu0
      %v1916 = vadd.f32 %v1867, %v1915
      %v1917 = vpop.f32.mrf.mxu0
      %v1918 = vadd.f32 %v1869, %v1917
      %1919 = vmatmul.bf16.gmra.mxu0 %v1241
      %v1920 = vpop.f32.mrf.mxu0
      %v1921 = vadd.f32 %v1872, %v1920
      %v1922 = vpop.f32.mrf.mxu0
      %v1923 = vadd.f32 %v1874, %v1922
      %1924 = vmatmul.bf16.gmra.mxu0 %v1244
      %v1925 = vpop.f32.mrf.mxu0
      %v1926 = vadd.f32 %v1877, %v1925
      %v1927 = vpop.f32.mrf.mxu0
      %v1928 = vadd.f32 %v1879, %v1927
      %1929 = vmatmul.bf16.gmra.mxu0 %v1247
      %v1930 = vpop.f32.mrf.mxu0
      %v1931 = vadd.f32 %v1882, %v1930
      %v1932 = vpop.f32.mrf.mxu0
      %v1933 = vadd.f32 %v1884, %v1932
      %1934 = vdwg.mxu0
      %v1935 = vmax.f32 %v1553, 0.0
      %v1936 = vmax.f32 %v1896, 0.0
      %v1937 = vmax.f32 %v1555, 0.0
      %v1938 = vmax.f32 %v1898, 0.0
      %v1939 = vmax.f32 %v1558, 0.0
      %v1940 = vmax.f32 %v1901, 0.0
      %v1941 = vmax.f32 %v1560, 0.0
      %v1942 = vmax.f32 %v1903, 0.0
      %v1943 = vmax.f32 %v1563, 0.0
      %v1944 = vmax.f32 %v1906, 0.0
      %v1945 = vmax.f32 %v1565, 0.0
      %v1946 = vmax.f32 %v1908, 0.0
      %v1947 = vmax.f32 %v1568, 0.0
      %v1948 = vmax.f32 %v1911, 0.0
      %v1949 = vmax.f32 %v1570, 0.0
      %v1950 = vmax.f32 %v1913, 0.0
      %v1951 = vmax.f32 %v1573, 0.0
      %v1952 = vmax.f32 %v1916, 0.0
      %v1953 = vmax.f32 %v1575, 0.0
      %v1954 = vmax.f32 %v1918, 0.0
      %v1955 = vmax.f32 %v1578, 0.0
      %v1956 = vmax.f32 %v1921, 0.0
      %v1957 = vmax.f32 %v1580, 0.0
      %v1958 = vmax.f32 %v1923, 0.0
      %v1959 = vmax.f32 %v1583, 0.0
      %v1960 = vmax.f32 %v1926, 0.0
      %v1961 = vmax.f32 %v1585, 0.0
      %v1962 = vmax.f32 %v1928, 0.0
      %v1963 = vmax.f32 %v1588, 0.0
      %v1964 = vmax.f32 %v1931, 0.0
      %v1965 = vmax.f32 %v1590, 0.0
      %v1966 = vmax.f32 %v1933, 0.0
      %v1967 = vpack.c.bf16 %v1937, %v1935
      %v1968 = vpack.c.bf16 %v1938, %v1936
      %v1969 = vpack.c.bf16 %v1941, %v1939
      %v1970 = vpack.c.bf16 %v1942, %v1940
      %v1971 = vpack.c.bf16 %v1945, %v1943
      %v1972 = vpack.c.bf16 %v1946, %v1944
      %v1973 = vpack.c.bf16 %v1949, %v1947
      %v1974 = vpack.c.bf16 %v1950, %v1948
      %v1975 = vpack.c.bf16 %v1953, %v1951
      %v1976 = vpack.c.bf16 %v1954, %v1952
      %v1977 = vpack.c.bf16 %v1957, %v1955
      %v1978 = vpack.c.bf16 %v1958, %v1956
      %v1979 = vpack.c.bf16 %v1961, %v1959
      %v1980 = vpack.c.bf16 %v1962, %v1960
      %v1981 = vpack.c.bf16 %v1965, %v1963
      %v1982 = vpack.c.bf16 %v1966, %v1964
      %v1983 = vld [vmem:[%s3] sm:$0xff]
      %v1984 = vld [vmem:[%s3 + $0x8] sm:$0xff]
      %v1985 = vld [vmem:[%s3 + $0x10] sm:$0xff]
      %v1986 = vld [vmem:[%s3 + $0x18] sm:$0xff]
      %v1987 = vld [vmem:[%s3 + $0x20] sm:$0xff]
      %v1988 = vld [vmem:[%s3 + $0x28] sm:$0xff]
      %v1989 = vld [vmem:[%s3 + $0x30] sm:$0xff]
      %v1990 = vld [vmem:[%s3 + $0x38] sm:$0xff]
      %v1991 = vld [vmem:[%s3 + $0x40] sm:$0xff]
      %v1992 = vld [vmem:[%s3 + $0x48] sm:$0xff]
      %v1993 = vld [vmem:[%s3 + $0x50] sm:$0xff]
      %v1994 = vld [vmem:[%s3 + $0x58] sm:$0xff]
      %v1995 = vld [vmem:[%s3 + $0x60] sm:$0xff]
      %v1996 = vld [vmem:[%s3 + $0x68] sm:$0xff]
      %v1997 = vld [vmem:[%s3 + $0x70] sm:$0xff]
      %v1998 = vld [vmem:[%s3 + $0x78] sm:$0xff]
      %v1999 = vld [vmem:[%s3 + $0x80] sm:$0xff]
      %v2000 = vld [vmem:[%s3 + $0x88] sm:$0xff]
      %v2001 = vld [vmem:[%s3 + $0x90] sm:$0xff]
      %v2002 = vld [vmem:[%s3 + $0x98] sm:$0xff]
      %v2003 = vld [vmem:[%s3 + $0xa0] sm:$0xff]
      %v2004 = vld [vmem:[%s3 + $0xa8] sm:$0xff]
      %v2005 = vld [vmem:[%s3 + $0xb0] sm:$0xff]
      %v2006 = vld [vmem:[%s3 + $0xb8] sm:$0xff]
      %v2007 = vld [vmem:[%s3 + $0xc0] sm:$0xff]
      %v2008 = vld [vmem:[%s3 + $0xc8] sm:$0xff]
      %v2009 = vld [vmem:[%s3 + $0xd0] sm:$0xff]
      %v2010 = vld [vmem:[%s3 + $0xd8] sm:$0xff]
      %v2011 = vld [vmem:[%s3 + $0xe0] sm:$0xff]
      %v2012 = vld [vmem:[%s3 + $0xe8] sm:$0xff]
      %v2013 = vld [vmem:[%s3 + $0xf0] sm:$0xff]
      %v2014 = vld [vmem:[%s3 + $0xf8] sm:$0xff]
      %v2015 = vld [vmem:[%s4] sm:$0x3]
      %v2017 = vperm.slane %v2015, 0
      %v2018 = vperm.slane %v2015, 1
      %v2053 = vunpack.c.l.b16 %v1983
      %v2054 = vunpack.c.h.b16 %v1983
      %v2055 = vunpack.c.l.b16 %v1984
      %v2056 = vunpack.c.h.b16 %v1984
      %v2057 = vunpack.c.l.b16 %v1985
      %v2058 = vunpack.c.h.b16 %v1985
      %v2059 = vunpack.c.l.b16 %v1986
      %v2060 = vunpack.c.h.b16 %v1986
      %v2061 = vunpack.c.l.b16 %v1987
      %v2062 = vunpack.c.h.b16 %v1987
      %v2063 = vunpack.c.l.b16 %v1988
      %v2064 = vunpack.c.h.b16 %v1988
      %v2065 = vunpack.c.l.b16 %v1989
      %v2066 = vunpack.c.h.b16 %v1989
      %v2067 = vunpack.c.l.b16 %v1990
      %v2068 = vunpack.c.h.b16 %v1990
      %v2069 = vunpack.c.l.b16 %v1991
      %v2070 = vunpack.c.h.b16 %v1991
      %v2071 = vunpack.c.l.b16 %v1992
      %v2072 = vunpack.c.h.b16 %v1992
      %v2073 = vunpack.c.l.b16 %v1993
      %v2074 = vunpack.c.h.b16 %v1993
      %v2075 = vunpack.c.l.b16 %v1994
      %v2076 = vunpack.c.h.b16 %v1994
      %v2077 = vunpack.c.l.b16 %v1995
      %v2078 = vunpack.c.h.b16 %v1995
      %v2079 = vunpack.c.l.b16 %v1996
      %v2080 = vunpack.c.h.b16 %v1996
      %v2081 = vunpack.c.l.b16 %v1997
      %v2082 = vunpack.c.h.b16 %v1997
      %v2083 = vunpack.c.l.b16 %v1998
      %v2084 = vunpack.c.h.b16 %v1998
      %v2085 = vunpack.c.l.b16 %v1999
      %v2086 = vunpack.c.h.b16 %v1999
      %v2087 = vunpack.c.l.b16 %v2000
      %v2088 = vunpack.c.h.b16 %v2000
      %v2089 = vunpack.c.l.b16 %v2001
      %v2090 = vunpack.c.h.b16 %v2001
      %v2091 = vunpack.c.l.b16 %v2002
      %v2092 = vunpack.c.h.b16 %v2002
      %v2093 = vunpack.c.l.b16 %v2003
      %v2094 = vunpack.c.h.b16 %v2003
      %v2095 = vunpack.c.l.b16 %v2004
      %v2096 = vunpack.c.h.b16 %v2004
      %v2097 = vunpack.c.l.b16 %v2005
      %v2098 = vunpack.c.h.b16 %v2005
      %v2099 = vunpack.c.l.b16 %v2006
      %v2100 = vunpack.c.h.b16 %v2006
      %v2101 = vunpack.c.l.b16 %v2007
      %v2102 = vunpack.c.h.b16 %v2007
      %v2103 = vunpack.c.l.b16 %v2008
      %v2104 = vunpack.c.h.b16 %v2008
      %v2105 = vunpack.c.l.b16 %v2009
      %v2106 = vunpack.c.h.b16 %v2009
      %v2107 = vunpack.c.l.b16 %v2010
      %v2108 = vunpack.c.h.b16 %v2010
      %v2109 = vunpack.c.l.b16 %v2011
      %v2110 = vunpack.c.h.b16 %v2011
      %v2111 = vunpack.c.l.b16 %v2012
      %v2112 = vunpack.c.h.b16 %v2012
      %v2113 = vunpack.c.l.b16 %v2013
      %v2114 = vunpack.c.h.b16 %v2013
      %v2115 = vunpack.c.l.b16 %v2014
      %v2116 = vunpack.c.h.b16 %v2014
      %v2117 = vpack.c.b16 %v2055, %v2053
      %v2118 = vpack.c.b16 %v2056, %v2054
      %v2119 = vpack.c.b16 %v2059, %v2057
      %v2120 = vpack.c.b16 %v2060, %v2058
      %v2121 = vpack.c.b16 %v2063, %v2061
      %v2122 = vpack.c.b16 %v2064, %v2062
      %v2123 = vpack.c.b16 %v2067, %v2065
      %v2124 = vpack.c.b16 %v2068, %v2066
      %v2125 = vpack.c.b16 %v2071, %v2069
      %v2126 = vpack.c.b16 %v2072, %v2070
      %v2127 = vpack.c.b16 %v2075, %v2073
      %v2128 = vpack.c.b16 %v2076, %v2074
      %v2129 = vpack.c.b16 %v2079, %v2077
      %v2130 = vpack.c.b16 %v2080, %v2078
      %v2131 = vpack.c.b16 %v2083, %v2081
      %v2132 = vpack.c.b16 %v2084, %v2082
      %v2133 = vpack.c.b16 %v2087, %v2085
      %v2134 = vpack.c.b16 %v2088, %v2086
      %v2135 = vpack.c.b16 %v2091, %v2089
      %v2136 = vpack.c.b16 %v2092, %v2090
      %v2137 = vpack.c.b16 %v2095, %v2093
      %v2138 = vpack.c.b16 %v2096, %v2094
      %v2139 = vpack.c.b16 %v2099, %v2097
      %v2140 = vpack.c.b16 %v2100, %v2098
      %v2141 = vpack.c.b16 %v2103, %v2101
      %v2142 = vpack.c.b16 %v2104, %v2102
      %v2143 = vpack.c.b16 %v2107, %v2105
      %v2144 = vpack.c.b16 %v2108, %v2106
      %v2145 = vpack.c.b16 %v2111, %v2109
      %v2146 = vpack.c.b16 %v2112, %v2110
      %v2147 = vpack.c.b16 %v2115, %v2113
      %v2148 = vpack.c.b16 %v2116, %v2114
      %2181 = vmatpush.bf16.msra.mxu0 %v2131
      %2182 = vmatpush.bf16.msra.mxu0 %v2129
      %2183 = vmatpush.bf16.msra.mxu0 %v2127
      %2184 = vmatpush.bf16.msra.mxu0 %v2125
      %2185 = vmatpush.bf16.msra.mxu0 %v2123
      %2186 = vmatpush.bf16.msra.mxu0 %v2121
      %2187 = vmatpush.bf16.msra.mxu0 %v2119
      %2188 = vmatpush.bf16.msra.mxu0 %v2117
      %2189 = vmatmul.bf16.gmra.mxu0 %v1967
      %v2190 = vpop.f32.mrf.mxu0
      %v2191 = vadd.f32 %v2017, %v2190
      %v2192 = vpop.f32.mrf.mxu0
      %v2193 = vadd.f32 %v2017, %v2192
      %2194 = vmatmul.bf16.gmra.mxu0 %v1969
      %v2195 = vpop.f32.mrf.mxu0
      %v2196 = vadd.f32 %v2017, %v2195
      %v2197 = vpop.f32.mrf.mxu0
      %v2198 = vadd.f32 %v2017, %v2197
      %2199 = vmatmul.bf16.gmra.mxu0 %v1971
      %v2200 = vpop.f32.mrf.mxu0
      %v2201 = vadd.f32 %v2017, %v2200
      %v2202 = vpop.f32.mrf.mxu0
      %v2203 = vadd.f32 %v2017, %v2202
      %2204 = vmatmul.bf16.gmra.mxu0 %v1973
      %v2205 = vpop.f32.mrf.mxu0
      %v2206 = vadd.f32 %v2017, %v2205
      %v2207 = vpop.f32.mrf.mxu0
      %v2208 = vadd.f32 %v2017, %v2207
      %2209 = vmatmul.bf16.gmra.mxu0 %v1975
      %v2210 = vpop.f32.mrf.mxu0
      %v2211 = vadd.f32 %v2017, %v2210
      %v2212 = vpop.f32.mrf.mxu0
      %v2213 = vadd.f32 %v2017, %v2212
      %2214 = vmatmul.bf16.gmra.mxu0 %v1977
      %v2215 = vpop.f32.mrf.mxu0
      %v2216 = vadd.f32 %v2017, %v2215
      %v2217 = vpop.f32.mrf.mxu0
      %v2218 = vadd.f32 %v2017, %v2217
      %2219 = vmatmul.bf16.gmra.mxu0 %v1979
      %v2220 = vpop.f32.mrf.mxu0
      %v2221 = vadd.f32 %v2017, %v2220
      %v2222 = vpop.f32.mrf.mxu0
      %v2223 = vadd.f32 %v2017, %v2222
      %2224 = vmatmul.bf16.gmra.mxu0 %v1981
      %v2225 = vpop.f32.mrf.mxu0
      %v2226 = vadd.f32 %v2017, %v2225
      %v2227 = vpop.f32.mrf.mxu0
      %v2228 = vadd.f32 %v2017, %v2227
      %2229 = vdwg.mxu0
      %2230 = vmatpush.bf16.msra.mxu0 %v2147
      %2231 = vmatpush.bf16.msra.mxu0 %v2145
      %2232 = vmatpush.bf16.msra.mxu0 %v2143
      %2233 = vmatpush.bf16.msra.mxu0 %v2141
      %2234 = vmatpush.bf16.msra.mxu0 %v2139
      %2235 = vmatpush.bf16.msra.mxu0 %v2137
      %2236 = vmatpush.bf16.msra.mxu0 %v2135
      %2237 = vmatpush.bf16.msra.mxu0 %v2133
      %2238 = vmatmul.bf16.gmra.mxu0 %v1968
      %v2239 = vpop.f32.mrf.mxu0
      %v2240 = vadd.f32 %v2191, %v2239
      %v2241 = vpop.f32.mrf.mxu0
      %v2242 = vadd.f32 %v2193, %v2241
      %2243 = vmatmul.bf16.gmra.mxu0 %v1970
      %v2244 = vpop.f32.mrf.mxu0
      %v2245 = vadd.f32 %v2196, %v2244
      %v2246 = vpop.f32.mrf.mxu0
      %v2247 = vadd.f32 %v2198, %v2246
      %2248 = vmatmul.bf16.gmra.mxu0 %v1972
      %v2249 = vpop.f32.mrf.mxu0
      %v2250 = vadd.f32 %v2201, %v2249
      %v2251 = vpop.f32.mrf.mxu0
      %v2252 = vadd.f32 %v2203, %v2251
      %2253 = vmatmul.bf16.gmra.mxu0 %v1974
      %v2254 = vpop.f32.mrf.mxu0
      %v2255 = vadd.f32 %v2206, %v2254
      %v2256 = vpop.f32.mrf.mxu0
      %v2257 = vadd.f32 %v2208, %v2256
      %2258 = vmatmul.bf16.gmra.mxu0 %v1976
      %v2259 = vpop.f32.mrf.mxu0
      %v2260 = vadd.f32 %v2211, %v2259
      %v2261 = vpop.f32.mrf.mxu0
      %v2262 = vadd.f32 %v2213, %v2261
      %2263 = vmatmul.bf16.gmra.mxu0 %v1978
      %v2264 = vpop.f32.mrf.mxu0
      %v2265 = vadd.f32 %v2216, %v2264
      %v2266 = vpop.f32.mrf.mxu0
      %v2267 = vadd.f32 %v2218, %v2266
      %2268 = vmatmul.bf16.gmra.mxu0 %v1980
      %v2269 = vpop.f32.mrf.mxu0
      %v2270 = vadd.f32 %v2221, %v2269
      %v2271 = vpop.f32.mrf.mxu0
      %v2272 = vadd.f32 %v2223, %v2271
      %2273 = vmatmul.bf16.gmra.mxu0 %v1982
      %v2274 = vpop.f32.mrf.mxu0
      %v2275 = vadd.f32 %v2226, %v2274
      %v2276 = vpop.f32.mrf.mxu0
      %v2277 = vadd.f32 %v2228, %v2276
      %2278 = vdwg.mxu0
      %2279 = vmatpush.bf16.msra.mxu0 %v2132
      %2280 = vmatpush.bf16.msra.mxu0 %v2130
      %2281 = vmatpush.bf16.msra.mxu0 %v2128
      %2282 = vmatpush.bf16.msra.mxu0 %v2126
      %2283 = vmatpush.bf16.msra.mxu0 %v2124
      %2284 = vmatpush.bf16.msra.mxu0 %v2122
      %2285 = vmatpush.bf16.msra.mxu0 %v2120
      %2286 = vmatpush.bf16.msra.mxu0 %v2118
      %2287 = vmatmul.bf16.gmra.mxu0 %v1967
      %v2288 = vpop.f32.mrf.mxu0
      %v2289 = vadd.f32 %v2018, %v2288
      %v2290 = vpop.f32.mrf.mxu0
      %v2291 = vadd.f32 %v2018, %v2290
      %2292 = vmatmul.bf16.gmra.mxu0 %v1969
      %v2293 = vpop.f32.mrf.mxu0
      %v2294 = vadd.f32 %v2018, %v2293
      %v2295 = vpop.f32.mrf.mxu0
      %v2296 = vadd.f32 %v2018, %v2295
      %2297 = vmatmul.bf16.gmra.mxu0 %v1971
      %v2298 = vpop.f32.mrf.mxu0
      %v2299 = vadd.f32 %v2018, %v2298
      %v2300 = vpop.f32.mrf.mxu0
      %v2301 = vadd.f32 %v2018, %v2300
      %2302 = vmatmul.bf16.gmra.mxu0 %v1973
      %v2303 = vpop.f32.mrf.mxu0
      %v2304 = vadd.f32 %v2018, %v2303
      %v2305 = vpop.f32.mrf.mxu0
      %v2306 = vadd.f32 %v2018, %v2305
      %2307 = vmatmul.bf16.gmra.mxu0 %v1975
      %v2308 = vpop.f32.mrf.mxu0
      %v2309 = vadd.f32 %v2018, %v2308
      %v2310 = vpop.f32.mrf.mxu0
      %v2311 = vadd.f32 %v2018, %v2310
      %2312 = vmatmul.bf16.gmra.mxu0 %v1977
      %v2313 = vpop.f32.mrf.mxu0
      %v2314 = vadd.f32 %v2018, %v2313
      %v2315 = vpop.f32.mrf.mxu0
      %v2316 = vadd.f32 %v2018, %v2315
      %2317 = vmatmul.bf16.gmra.mxu0 %v1979
      %v2318 = vpop.f32.mrf.mxu0
      %v2319 = vadd.f32 %v2018, %v2318
      %v2320 = vpop.f32.mrf.mxu0
      %v2321 = vadd.f32 %v2018, %v2320
      %2322 = vmatmul.bf16.gmra.mxu0 %v1981
      %v2323 = vpop.f32.mrf.mxu0
      %v2324 = vadd.f32 %v2018, %v2323
      %v2325 = vpop.f32.mrf.mxu0
      %v2326 = vadd.f32 %v2018, %v2325
      %2327 = vdwg.mxu0
      %2328 = vmatpush.bf16.msra.mxu0 %v2148
      %2329 = vmatpush.bf16.msra.mxu0 %v2146
      %2330 = vmatpush.bf16.msra.mxu0 %v2144
      %2331 = vmatpush.bf16.msra.mxu0 %v2142
      %2332 = vmatpush.bf16.msra.mxu0 %v2140
      %2333 = vmatpush.bf16.msra.mxu0 %v2138
      %2334 = vmatpush.bf16.msra.mxu0 %v2136
      %2335 = vmatpush.bf16.msra.mxu0 %v2134
      %2336 = vmatmul.bf16.gmra.mxu0 %v1968
      %v2337 = vpop.f32.mrf.mxu0
      %v2338 = vadd.f32 %v2289, %v2337
      %v2339 = vpop.f32.mrf.mxu0
      %v2340 = vadd.f32 %v2291, %v2339
      %2341 = vmatmul.bf16.gmra.mxu0 %v1970
      %v2342 = vpop.f32.mrf.mxu0
      %v2343 = vadd.f32 %v2294, %v2342
      %v2344 = vpop.f32.mrf.mxu0
      %v2345 = vadd.f32 %v2296, %v2344
      %2346 = vmatmul.bf16.gmra.mxu0 %v1972
      %v2347 = vpop.f32.mrf.mxu0
      %v2348 = vadd.f32 %v2299, %v2347
      %v2349 = vpop.f32.mrf.mxu0
      %v2350 = vadd.f32 %v2301, %v2349
      %2351 = vmatmul.bf16.gmra.mxu0 %v1974
      %v2352 = vpop.f32.mrf.mxu0
      %v2353 = vadd.f32 %v2304, %v2352
      %v2354 = vpop.f32.mrf.mxu0
      %v2355 = vadd.f32 %v2306, %v2354
      %2356 = vmatmul.bf16.gmra.mxu0 %v1976
      %v2357 = vpop.f32.mrf.mxu0
      %v2358 = vadd.f32 %v2309, %v2357
      %v2359 = vpop.f32.mrf.mxu0
      %v2360 = vadd.f32 %v2311, %v2359
      %2361 = vmatmul.bf16.gmra.mxu0 %v1978
      %v2362 = vpop.f32.mrf.mxu0
      %v2363 = vadd.f32 %v2314, %v2362
      %v2364 = vpop.f32.mrf.mxu0
      %v2365 = vadd.f32 %v2316, %v2364
      %2366 = vmatmul.bf16.gmra.mxu0 %v1980
      %v2367 = vpop.f32.mrf.mxu0
      %v2368 = vadd.f32 %v2319, %v2367
      %v2369 = vpop.f32.mrf.mxu0
      %v2370 = vadd.f32 %v2321, %v2369
      %2371 = vmatmul.bf16.gmra.mxu0 %v1982
      %v2372 = vpop.f32.mrf.mxu0
      %v2373 = vadd.f32 %v2324, %v2372
      %v2374 = vpop.f32.mrf.mxu0
      %v2375 = vadd.f32 %v2326, %v2374
      %2376 = vdwg.mxu0
      %v2377 = vmax.f32 %v2240, 0.0
      %v2378 = vmax.f32 %v2338, 0.0
      %v2379 = vmax.f32 %v2242, 0.0
      %v2380 = vmax.f32 %v2340, 0.0
      %v2381 = vmax.f32 %v2245, 0.0
      %v2382 = vmax.f32 %v2343, 0.0
      %v2383 = vmax.f32 %v2247, 0.0
      %v2384 = vmax.f32 %v2345, 0.0
      %v2385 = vmax.f32 %v2250, 0.0
      %v2386 = vmax.f32 %v2348, 0.0
      %v2387 = vmax.f32 %v2252, 0.0
      %v2388 = vmax.f32 %v2350, 0.0
      %v2389 = vmax.f32 %v2255, 0.0
      %v2390 = vmax.f32 %v2353, 0.0
      %v2391 = vmax.f32 %v2257, 0.0
      %v2392 = vmax.f32 %v2355, 0.0
      %v2393 = vmax.f32 %v2260, 0.0
      %v2394 = vmax.f32 %v2358, 0.0
      %v2395 = vmax.f32 %v2262, 0.0
      %v2396 = vmax.f32 %v2360, 0.0
      %v2397 = vmax.f32 %v2265, 0.0
      %v2398 = vmax.f32 %v2363, 0.0
      %v2399 = vmax.f32 %v2267, 0.0
      %v2400 = vmax.f32 %v2365, 0.0
      %v2401 = vmax.f32 %v2270, 0.0
      %v2402 = vmax.f32 %v2368, 0.0
      %v2403 = vmax.f32 %v2272, 0.0
      %v2404 = vmax.f32 %v2370, 0.0
      %v2405 = vmax.f32 %v2275, 0.0
      %v2406 = vmax.f32 %v2373, 0.0
      %v2407 = vmax.f32 %v2277, 0.0
      %v2408 = vmax.f32 %v2375, 0.0
      %v2409 = vpack.c.bf16 %v2379, %v2377
      %v2410 = vpack.c.bf16 %v2380, %v2378
      %v2411 = vpack.c.bf16 %v2383, %v2381
      %v2412 = vpack.c.bf16 %v2384, %v2382
      %v2413 = vpack.c.bf16 %v2387, %v2385
      %v2414 = vpack.c.bf16 %v2388, %v2386
      %v2415 = vpack.c.bf16 %v2391, %v2389
      %v2416 = vpack.c.bf16 %v2392, %v2390
      %v2417 = vpack.c.bf16 %v2395, %v2393
      %v2418 = vpack.c.bf16 %v2396, %v2394
      %v2419 = vpack.c.bf16 %v2399, %v2397
      %v2420 = vpack.c.bf16 %v2400, %v2398
      %v2421 = vpack.c.bf16 %v2403, %v2401
      %v2422 = vpack.c.bf16 %v2404, %v2402
      %v2423 = vpack.c.bf16 %v2407, %v2405
      %v2424 = vpack.c.bf16 %v2408, %v2406
      %v2425 = vld [vmem:[%s5] sm:$0xf]
      %v2426 = vld [vmem:[%s5 + $0x4] sm:$0xf]
      %v2427 = vld [vmem:[%s5 + $0x8] sm:$0xf]
      %v2428 = vld [vmem:[%s5 + $0xc] sm:$0xf]
      %v2429 = vld [vmem:[%s5 + $0x10] sm:$0xf]
      %v2430 = vld [vmem:[%s5 + $0x14] sm:$0xf]
      %v2431 = vld [vmem:[%s5 + $0x18] sm:$0xf]
      %v2432 = vld [vmem:[%s5 + $0x1c] sm:$0xf]
      %v2433 = vld [vmem:[%s5 + $0x20] sm:$0xf]
      %v2434 = vld [vmem:[%s5 + $0x24] sm:$0xf]
      %v2435 = vld [vmem:[%s5 + $0x28] sm:$0xf]
      %v2436 = vld [vmem:[%s5 + $0x2c] sm:$0xf]
      %v2437 = vld [vmem:[%s5 + $0x30] sm:$0xf]
      %v2438 = vld [vmem:[%s5 + $0x34] sm:$0xf]
      %v2439 = vld [vmem:[%s5 + $0x38] sm:$0xf]
      %v2440 = vld [vmem:[%s5 + $0x3c] sm:$0xf]
      %v2441 = vld [vmem:[%s5 + $0x40] sm:$0xf]
      %v2442 = vld [vmem:[%s5 + $0x44] sm:$0xf]
      %v2443 = vld [vmem:[%s5 + $0x48] sm:$0xf]
      %v2444 = vld [vmem:[%s5 + $0x4c] sm:$0xf]
      %v2445 = vld [vmem:[%s5 + $0x50] sm:$0xf]
      %v2446 = vld [vmem:[%s5 + $0x54] sm:$0xf]
      %v2447 = vld [vmem:[%s5 + $0x58] sm:$0xf]
      %v2448 = vld [vmem:[%s5 + $0x5c] sm:$0xf]
      %v2449 = vld [vmem:[%s5 + $0x60] sm:$0xf]
      %v2450 = vld [vmem:[%s5 + $0x64] sm:$0xf]
      %v2451 = vld [vmem:[%s5 + $0x68] sm:$0xf]
      %v2452 = vld [vmem:[%s5 + $0x6c] sm:$0xf]
      %v2453 = vld [vmem:[%s5 + $0x70] sm:$0xf]
      %v2454 = vld [vmem:[%s5 + $0x74] sm:$0xf]
      %v2455 = vld [vmem:[%s5 + $0x78] sm:$0xf]
      %v2456 = vld [vmem:[%s5 + $0x7c] sm:$0xf]
      %v2457 = vld [vmem:[%s6] sm:$0x1]
      %v2459 = vperm.slane %v2457, 0
      %v2493 = vunpack.c.l.b16 %v2425
      %v2494 = vunpack.c.l.b16 %v2426
      %v2495 = vunpack.c.l.b16 %v2427
      %v2496 = vunpack.c.l.b16 %v2428
      %v2497 = vunpack.c.l.b16 %v2429
      %v2498 = vunpack.c.l.b16 %v2430
      %v2499 = vunpack.c.l.b16 %v2431
      %v2500 = vunpack.c.l.b16 %v2432
      %v2501 = vunpack.c.l.b16 %v2433
      %v2502 = vunpack.c.l.b16 %v2434
      %v2503 = vunpack.c.l.b16 %v2435
      %v2504 = vunpack.c.l.b16 %v2436
      %v2505 = vunpack.c.l.b16 %v2437
      %v2506 = vunpack.c.l.b16 %v2438
      %v2507 = vunpack.c.l.b16 %v2439
      %v2508 = vunpack.c.l.b16 %v2440
      %v2509 = vunpack.c.l.b16 %v2441
      %v2510 = vunpack.c.l.b16 %v2442
      %v2511 = vunpack.c.l.b16 %v2443
      %v2512 = vunpack.c.l.b16 %v2444
      %v2513 = vunpack.c.l.b16 %v2445
      %v2514 = vunpack.c.l.b16 %v2446
      %v2515 = vunpack.c.l.b16 %v2447
      %v2516 = vunpack.c.l.b16 %v2448
      %v2517 = vunpack.c.l.b16 %v2449
      %v2518 = vunpack.c.l.b16 %v2450
      %v2519 = vunpack.c.l.b16 %v2451
      %v2520 = vunpack.c.l.b16 %v2452
      %v2521 = vunpack.c.l.b16 %v2453
      %v2522 = vunpack.c.l.b16 %v2454
      %v2523 = vunpack.c.l.b16 %v2455
      %v2524 = vunpack.c.l.b16 %v2456
      %v2525 = vpack.c.b16 %v2494, %v2493
      %v2526 = vpack.c.b16 %v2496, %v2495
      %v2527 = vpack.c.b16 %v2498, %v2497
      %v2528 = vpack.c.b16 %v2500, %v2499
      %v2529 = vpack.c.b16 %v2502, %v2501
      %v2530 = vpack.c.b16 %v2504, %v2503
      %v2531 = vpack.c.b16 %v2506, %v2505
      %v2532 = vpack.c.b16 %v2508, %v2507
      %v2533 = vpack.c.b16 %v2510, %v2509
      %v2534 = vpack.c.b16 %v2512, %v2511
      %v2535 = vpack.c.b16 %v2514, %v2513
      %v2536 = vpack.c.b16 %v2516, %v2515
      %v2537 = vpack.c.b16 %v2518, %v2517
      %v2538 = vpack.c.b16 %v2520, %v2519
      %v2539 = vpack.c.b16 %v2522, %v2521
      %v2540 = vpack.c.b16 %v2524, %v2523
      %2557 = vmatpush.bf16.msra.mxu0 %v2532
      %2558 = vmatpush.bf16.msra.mxu0 %v2531
      %2559 = vmatpush.bf16.msra.mxu0 %v2530
      %2560 = vmatpush.bf16.msra.mxu0 %v2529
      %2561 = vmatpush.bf16.msra.mxu0 %v2528
      %2562 = vmatpush.bf16.msra.mxu0 %v2527
      %2563 = vmatpush.bf16.msra.mxu0 %v2526
      %2564 = vmatpush.bf16.msra.mxu0 %v2525
      %2565 = vmatmul.bf16.gmra.mxu0 %v2409
      %v2566 = vpop.f32.mrf.mxu0
      %v2567 = vadd.f32 %v2459, %v2566
      %v2568 = vpop.f32.mrf.mxu0
      %v2569 = vadd.f32 %v2459, %v2568
      %2570 = vmatmul.bf16.gmra.mxu0 %v2411
      %v2571 = vpop.f32.mrf.mxu0
      %v2572 = vadd.f32 %v2459, %v2571
      %v2573 = vpop.f32.mrf.mxu0
      %v2574 = vadd.f32 %v2459, %v2573
      %2575 = vmatmul.bf16.gmra.mxu0 %v2413
      %v2576 = vpop.f32.mrf.mxu0
      %v2577 = vadd.f32 %v2459, %v2576
      %v2578 = vpop.f32.mrf.mxu0
      %v2579 = vadd.f32 %v2459, %v2578
      %2580 = vmatmul.bf16.gmra.mxu0 %v2415
      %v2581 = vpop.f32.mrf.mxu0
      %v2582 = vadd.f32 %v2459, %v2581
      %v2583 = vpop.f32.mrf.mxu0
      %v2584 = vadd.f32 %v2459, %v2583
      %2585 = vmatmul.bf16.gmra.mxu0 %v2417
      %v2586 = vpop.f32.mrf.mxu0
      %v2587 = vadd.f32 %v2459, %v2586
      %v2588 = vpop.f32.mrf.mxu0
      %v2589 = vadd.f32 %v2459, %v2588
      %2590 = vmatmul.bf16.gmra.mxu0 %v2419
      %v2591 = vpop.f32.mrf.mxu0
      %v2592 = vadd.f32 %v2459, %v2591
      %v2593 = vpop.f32.mrf.mxu0
      %v2594 = vadd.f32 %v2459, %v2593
      %2595 = vmatmul.bf16.gmra.mxu0 %v2421
      %v2596 = vpop.f32.mrf.mxu0
      %v2597 = vadd.f32 %v2459, %v2596
      %v2598 = vpop.f32.mrf.mxu0
      %v2599 = vadd.f32 %v2459, %v2598
      %2600 = vmatmul.bf16.gmra.mxu0 %v2423
      %v2601 = vpop.f32.mrf.mxu0
      %v2602 = vadd.f32 %v2459, %v2601
      %v2603 = vpop.f32.mrf.mxu0
      %v2604 = vadd.f32 %v2459, %v2603
      %2605 = vdwg.mxu0
      %2606 = vmatpush.bf16.msra.mxu0 %v2540
      %2607 = vmatpush.bf16.msra.mxu0 %v2539
      %2608 = vmatpush.bf16.msra.mxu0 %v2538
      %2609 = vmatpush.bf16.msra.mxu0 %v2537
      %2610 = vmatpush.bf16.msra.mxu0 %v2536
      %2611 = vmatpush.bf16.msra.mxu0 %v2535
      %2612 = vmatpush.bf16.msra.mxu0 %v2534
      %2613 = vmatpush.bf16.msra.mxu0 %v2533
      %2614 = vmatmul.bf16.gmra.mxu0 %v2410
      %v2615 = vpop.f32.mrf.mxu0
      %v2616 = vadd.f32 %v2567, %v2615
      %v2617 = vpop.f32.mrf.mxu0
      %v2618 = vadd.f32 %v2569, %v2617
      %2619 = vmatmul.bf16.gmra.mxu0 %v2412
      %v2620 = vpop.f32.mrf.mxu0
      %v2621 = vadd.f32 %v2572, %v2620
      %v2622 = vpop.f32.mrf.mxu0
      %v2623 = vadd.f32 %v2574, %v2622
      %2624 = vmatmul.bf16.gmra.mxu0 %v2414
      %v2625 = vpop.f32.mrf.mxu0
      %v2626 = vadd.f32 %v2577, %v2625
      %v2627 = vpop.f32.mrf.mxu0
      %v2628 = vadd.f32 %v2579, %v2627
      %2629 = vmatmul.bf16.gmra.mxu0 %v2416
      %v2630 = vpop.f32.mrf.mxu0
      %v2631 = vadd.f32 %v2582, %v2630
      %v2632 = vpop.f32.mrf.mxu0
      %v2633 = vadd.f32 %v2584, %v2632
      %2634 = vmatmul.bf16.gmra.mxu0 %v2418
      %v2635 = vpop.f32.mrf.mxu0
      %v2636 = vadd.f32 %v2587, %v2635
      %v2637 = vpop.f32.mrf.mxu0
      %v2638 = vadd.f32 %v2589, %v2637
      %2639 = vmatmul.bf16.gmra.mxu0 %v2420
      %v2640 = vpop.f32.mrf.mxu0
      %v2641 = vadd.f32 %v2592, %v2640
      %v2642 = vpop.f32.mrf.mxu0
      %v2643 = vadd.f32 %v2594, %v2642
      %2644 = vmatmul.bf16.gmra.mxu0 %v2422
      %v2645 = vpop.f32.mrf.mxu0
      %v2646 = vadd.f32 %v2597, %v2645
      %v2647 = vpop.f32.mrf.mxu0
      %v2648 = vadd.f32 %v2599, %v2647
      %2649 = vmatmul.bf16.gmra.mxu0 %v2424
      %v2650 = vpop.f32.mrf.mxu0
      %v2651 = vadd.f32 %v2602, %v2650
      %v2652 = vpop.f32.mrf.mxu0
      %v2653 = vadd.f32 %v2604, %v2652
      %2654 = vdwg.mxu0
      %2655 = vst [vmem:[%s283] sm:$0xff] %v2616
      %2656 = vst [vmem:[%s283 + $0x8] sm:$0xff] %v2618
      %2657 = vst [vmem:[%s283 + $0x10] sm:$0xff] %v2621
      %2658 = vst [vmem:[%s283 + $0x18] sm:$0xff] %v2623
      %2659 = vst [vmem:[%s283 + $0x20] sm:$0xff] %v2626
      %2660 = vst [vmem:[%s283 + $0x28] sm:$0xff] %v2628
      %2661 = vst [vmem:[%s283 + $0x30] sm:$0xff] %v2631
      %2662 = vst [vmem:[%s283 + $0x38] sm:$0xff] %v2633
      %2663 = vst [vmem:[%s283 + $0x40] sm:$0xff] %v2636
      %2664 = vst [vmem:[%s283 + $0x48] sm:$0xff] %v2638
      %2665 = vst [vmem:[%s283 + $0x50] sm:$0xff] %v2641
      %2666 = vst [vmem:[%s283 + $0x58] sm:$0xff] %v2643
      %2667 = vst [vmem:[%s283 + $0x60] sm:$0xff] %v2646
      %2668 = vst [vmem:[%s283 + $0x68] sm:$0xff] %v2648
      %2669 = vst [vmem:[%s283 + $0x70] sm:$0xff] %v2651
      %2670 = vst [vmem:[%s283 + $0x78] sm:$0xff] %v2653
      %s2671 = smul.u32 16, %s18
      %p2672 = scmp.lt.s32.totalorder %s2671, 31
      %s2673 = scalar_select %p2672, %s2671, 31
      %s2674 = smul.addr %s2673, 8
      %s2675 = scalar_lea.vmem %s7, %s2674
      // Predicated region
      $region49: #{mnist_2nn_forward.1} parent=47 // pred_check
        %p2676 = pneg %p188
      $region50: #{mnist_2nn_forward.1} parent=47 // pred_check_branch
        %2678 = sbr.rel (%p2676) target = $region52
      $region51: #{mnist_2nn_forward.1} parent=47 // pred_region
        %s2679 = smul.u32 16, %s18
      $region52: #{mnist_2nn_forward.1} parent=47 // pred_fallthru
        _
    $region48: #{mnist_2nn_forward.1} parent=5 // pred_fallthru
      _
    %p2680 = scmp.le.s32.totalorder 2, %s13
    // Predicated region
    $region53: #{mnist_2nn_forward.1} parent=5 // pred_check
      %p2681 = pneg %p2680
    $region54: #{mnist_2nn_forward.1} parent=5 // pred_check_branch
      %2683 = sbr.rel (%p2681) target = $region56
    $region55: #{mnist_2nn_forward.1} parent=5 // pred_region
      %s2684 = ssub.s32 %s13, 2
      // Predicated region
      $region57: #{mnist_2nn_forward.1} parent=55 // pred_check
        %p2685 = pneg %p194
      $region58: #{mnist_2nn_forward.1} parent=55 // pred_check_branch
        %2687 = sbr.rel (%p2685) target = $region60
      $region59: #{mnist_2nn_forward.1} parent=55 // pred_region
        %s2688 = smul.u32 16, %s19
        %p2689 = scmp.lt.s32.totalorder %s2688, 31
        %s2690 = scalar_select %p2689, %s2688, 31
        %s2691 = smul.addr %s2690, 8
        %s2692 = scalar_lea.vmem %s7, %s2691
      $region60: #{mnist_2nn_forward.1} parent=55 // pred_fallthru
        _
    $region56: #{mnist_2nn_forward.1} parent=5 // pred_fallthru
      _
  $region6: #{mnist_2nn_forward.1} parent=0 // loop_footer
    %s17 = sadd.s32 1, %s13
  $region7: #{mnist_2nn_forward.1} parent=0 // loop_footer_branch
    %12 = sbr.rel target = $region3
  $region8: #{mnist_2nn_forward.1} parent=0 // loop_exit
    _

</llo_original>
